<compile_context>
chip_gen: v7x
topology: tpu7x:2x2x1
jax: 0.10.0
libtpu: 0.0.40
codegen_flags: <defaults>
</compile_context>

<pallas_src>
import functools
import math

import jax
import jax.numpy as jnp
from jax.experimental import pallas as pl
from jax.experimental.pallas import tpu as pltpu

LN_EPS = 1e-5


def _round_up(x, m):
    return ((x + m - 1) // m) * m


def _ln_fused(v, g, b, inv_h):
    """Single-pass LayerNorm over the last axis.

    `v` may be lane-padded with zeros beyond the true hidden size; `inv_h` is
    1/true_H so the statistics are taken over real features only (padded lanes
    contribute exact zeros to both sums). `g`/`b` are zero-padded, so padded
    output lanes stay exactly zero.
    """
    s = jnp.sum(v, axis=-1, keepdims=True)
    s2 = jnp.sum(v * v, axis=-1, keepdims=True)
    mu = s * inv_h
    var = jnp.maximum(s2 * inv_h - mu * mu, 0.0)
    return (v - mu) * jax.lax.rsqrt(var + LN_EPS) * g + b


def _layer(act, wc, wf1, wf2, vecs, inv_h):
    """One MEPALayer on an f32 (TM, HP) activation.

    vecs rows: 0=bc(=S@b1) 1=ln1_g 2=ln1_b+bias 3=ln2_g 4=ln2_b 5=bf1 6=bf2 7=pad
    """
    bc, g1, be1 = vecs[0:1], vecs[1:2], vecs[2:3]
    g2, be2 = vecs[3:4], vecs[4:5]
    bf1, bf2 = vecs[5:6], vecs[6:7]

    xb = act.astype(jnp.bfloat16)
    y2 = jnp.dot(xb, wc, preferred_element_type=jnp.float32) + bc
    z = _ln_fused(y2, g1, be1, inv_h)                 # learned bias folded into be1
    lnz = _ln_fused(z, g2, be2, inv_h)
    h = jnp.maximum(
        jnp.dot(lnz.astype(jnp.bfloat16), wf1, preferred_element_type=jnp.float32)
        + bf1, 0.0)
    core = jnp.dot(h.astype(jnp.bfloat16), wf2,
                   preferred_element_type=jnp.float32) + bf2
    return core + z


# ----------------------------- kernels ---------------------------------------

def mepa_resident_kernel(x_ref, wc_ref, wf1_ref, wf2_ref, vec_ref, out_ref,
                         *, num_layers, inv_h):
    """All-layer weights resident in VMEM; grid = (row_tiles,)."""
    act = x_ref[...]
    if num_layers <= 8:
        # Short static loop: unroll with static indices (best LLO visibility).
        for l in range(num_layers):
            act = _layer(act, wc_ref[l], wf1_ref[l], wf2_ref[l], vec_ref[l], inv_h)
    else:
        def body(l, a):
            return _layer(a, wc_ref[l], wf1_ref[l], wf2_ref[l], vec_ref[l], inv_h)
        act = jax.lax.fori_loop(0, num_layers, body, act)
    out_ref[...] = act


def mepa_streamed_kernel(x_ref, wc_ref, wf1_ref, wf2_ref, vec_ref, out_ref, *, inv_h):
    """Per-layer weight streaming; grid = (row_tiles, layers); out is resident."""
    l = pl.program_id(1)

    @pl.when(l == 0)
    def _():
        out_ref[...] = x_ref[...]

    out_ref[...] = _layer(out_ref[...], wc_ref[...], wf1_ref[...], wf2_ref[...],
                          vec_ref[...], inv_h)


# ----------------------------- parameter prep --------------------------------

def prepare_params(params, H, HP):
    """Fold scaling into Linear1 and bias into LN1 beta; pre-transpose to
    [in, out]; pad H->HP; bf16 matrices; pack per-layer vectors into (L,8,HP)."""
    L = params["w1"].shape[0]
    pad_m = ((0, 0), (0, HP - H), (0, HP - H))

    # (x @ W1^T + b1) @ S^T == x @ (S @ W1)^T + (S @ b1)
    wc = jnp.einsum("lij,ljk->lik", params["scaling"], params["w1"])
    bc = jnp.einsum("lij,lj->li", params["scaling"], params["b1"])

    def mat(w):   # torch layout (L, out, in) -> padded transposed (L, in, out), bf16
        return jnp.pad(jnp.swapaxes(w, 1, 2), pad_m).astype(jnp.bfloat16)

    def vec(v):   # (L, H) -> (L, HP) f32, zero-padded (keeps padded lanes at zero)
        return jnp.pad(v.astype(jnp.float32), ((0, 0), (0, HP - H)))

    vecs = jnp.stack([
        vec(bc),
        vec(params["ln1_g"]),
        vec(params["ln1_b"] + params["bias"]),     # extra learned bias folded in
        vec(params["ln2_g"]),
        vec(params["ln2_b"]),
        vec(params["bf1"]),
        vec(params["bf2"]),
        jnp.zeros((L, HP), jnp.float32),           # pad row -> 8 sublanes
    ], axis=1)                                     # (L, 8, HP)

    return {"wc": mat(wc), "wf1": mat(params["wf1"]), "wf2": mat(params["wf2"]),
            "vecs": vecs}


# ----------------------------- wrapper ----------------------------------------

def mepa_forward(x, params, *, force_streamed=False):
    """x: (B, H) or (B, S, H) float32; params: dict of stacked per-layer arrays."""
    if x.ndim > 2:
        x = x.reshape(x.shape[0], x.shape[1], -1)      # mirror the torch reshape
    lead = x.shape[:-1]
    H = x.shape[-1]
    L = params["w1"].shape[0]
    HP = _round_up(H, 128)                             # lane-dense hidden dim

    x2 = x.reshape(-1, H).astype(jnp.float32)
    N = x2.shape[0]

    # --- generation-aware VMEM capacity ---------------------------------------
    try:
        vmem_cap = pltpu.get_tpu_info().vmem_capacity_bytes
    except Exception:
        vmem_cap = 64 * 1024 * 1024                    # v7x-safe fallback
    budget = (3 * vmem_cap) // 4                       # usable slice of VMEM
    headroom = 8 * 1024 * 1024                         # compiler/internal scratch

    # --- row tile --------------------------------------------------------------
    # Big generations (128 MiB VMEM: v5e/v6e) can afford larger row tiles than v7x.
    tm_max = 1024 if vmem_cap >= (100 * 1024 * 1024) else 512
    if N <= 512:
        TM = _round_up(max(N, 1), 8)                   # single tile, overhead-bound
    else:
        # multiple of 256 for the 256-wide MXU; >= 2 tiles so both v7x TCs work
        TM = max(256, min(tm_max, _round_up((N + 1) // 2, 256)))
    NP = _round_up(N, TM)
    RT = NP // TM

    # --- exact VMEM accounting (double-buffered blocks + headroom) -------------
    w_layer = 3 * HP * HP * 2 + 8 * HP * 4             # 3 bf16 mats + vector pack
    io_bytes = TM * HP * 4                             # one f32 activation tile
    resident_total = 2 * L * w_layer + 4 * io_bytes + headroom
    streamed_total = 2 * w_layer + 4 * io_bytes + headroom
    # TODO(synk): if even streamed_total exceeds the budget (HP >= ~4k on v7x),
    # tile the HP x HP weight matmuls along the output dim with an extra grid axis.

    use_resident = (not force_streamed) and (resident_total <= budget)
    total = resident_total if use_resident else streamed_total
    vmem_limit = int(min(max(total, 32 * 1024 * 1024), vmem_cap))

    xp = jnp.pad(x2, ((0, NP - N), (0, HP - H)))
    p = prepare_params(params, H, HP)

    if use_resident:
        io_spec = pl.BlockSpec((TM, HP), lambda r: (r, 0))
        w_spec = pl.BlockSpec((L, HP, HP), lambda r: (0, 0, 0))
        v_spec = pl.BlockSpec((L, 8, HP), lambda r: (0, 0, 0))
        out = pl.pallas_call(
            functools.partial(mepa_resident_kernel, num_layers=L, inv_h=1.0 / H),
            out_shape=jax.ShapeDtypeStruct((NP, HP), jnp.float32),
            grid_spec=pltpu.PrefetchScalarGridSpec(
                num_scalar_prefetch=0,
                grid=(RT,),
                in_specs=[io_spec, w_spec, w_spec, w_spec, v_spec],
                out_specs=io_spec,
            ),
            compiler_params=pltpu.CompilerParams(
                dimension_semantics=("parallel",),
                vmem_limit_bytes=vmem_limit),
        )(xp, p["wc"], p["wf1"], p["wf2"], p["vecs"])
    else:
        io_spec = pl.BlockSpec((TM, HP), lambda r, l: (r, 0))
        mat_spec = pl.BlockSpec((None, HP, HP), lambda r, l: (l, 0, 0))
        vec_spec = pl.BlockSpec((None, 8, HP), lambda r, l: (l, 0, 0))
        out = pl.pallas_call(
            functools.partial(mepa_streamed_kernel, inv_h=1.0 / H),
            out_shape=jax.ShapeDtypeStruct((NP, HP), jnp.float32),
            grid_spec=pltpu.PrefetchScalarGridSpec(
                num_scalar_prefetch=0,
                grid=(RT, L),
                in_specs=[io_spec, mat_spec, mat_spec, mat_spec, vec_spec],
                out_specs=io_spec,
            ),
            compiler_params=pltpu.CompilerParams(
                dimension_semantics=("parallel", "arbitrary"),
                vmem_limit_bytes=vmem_limit),
        )(xp, p["wc"], p["wf1"], p["wf2"], p["vecs"])

    return out[:N, :H].reshape(lead + (H,))


# ----------------------------- references -------------------------------------

def mepa_reference(x, params):
    """Pure-f32 JAX reference mirroring the PyTorch forward exactly (unfolded)."""
    if x.ndim > 2:
        x = x.reshape(x.shape[0], x.shape[1], -1)
    L = params["w1"].shape[0]

    def ln(v, g, b):
        mu = jnp.mean(v, axis=-1, keepdims=True)
        var = jnp.mean((v - mu) ** 2, axis=-1, keepdims=True)
        return (v - mu) * jax.lax.rsqrt(var + LN_EPS) * g + b

    for l in range(L):
        y1 = x @ params["w1"][l].T + params["b1"][l]
        y2 = y1 @ params["scaling"][l].T
        z = ln(y2, params["ln1_g"][l], params["ln1_b"][l]) + params["bias"][l]
        lnz = ln(z, params["ln2_g"][l], params["ln2_b"][l])
        h = jnp.maximum(lnz @ params["wf1"][l].T + params["bf1"][l], 0.0)
        x = (h @ params["wf2"][l].T + params["bf2"][l]) + z
    return x


def mepa_reference_prepped(x, prepped, H, HP):
    """Matched-precision reference: identical folded/bf16 weights, cast points and
    padded-lane math as the kernel (reuses _layer)."""
    if x.ndim > 2:
        x = x.reshape(x.shape[0], x.shape[1], -1)
    lead = x.shape[:-1]
    act = jnp.pad(x.reshape(-1, H).astype(jnp.float32), ((0, 0), (0, HP - H)))
    L = prepped["wc"].shape[0]
    for l in range(L):
        act = _layer(act, prepped["wc"][l], prepped["wf1"][l], prepped["wf2"][l],
                     prepped["vecs"][l], 1.0 / H)
    return act[:, :H].reshape(lead + (H,))


def init_params(key, hidden_dim, layers):
    H, L = hidden_dim, layers
    ks = jax.random.split(key, 8)
    bound = 1.0 / math.sqrt(H)
    return {
        # nn.Linear weight: kaiming_normal fan_out, sigmoid gain=1 -> std 1/sqrt(H)
        "w1": jax.random.normal(ks[0], (L, H, H), jnp.float32) / math.sqrt(H),
        "b1": jax.random.uniform(ks[1], (L, H), jnp.float32, -bound, bound),
        "scaling": jax.random.uniform(ks[2], (L, H, H), jnp.float32, 0.0, 1.0),
        "ln1_g": jnp.ones((L, H), jnp.float32),
        "ln1_b": jnp.zeros((L, H), jnp.float32),
        "bias": jax.random.uniform(ks[3], (L, H), jnp.float32, -bound, bound),
        "ln2_g": jnp.ones((L, H), jnp.float32),
        "ln2_b": jnp.zeros((L, H), jnp.float32),
        "wf1": jax.random.uniform(ks[4], (L, H, H), jnp.float32, -bound, bound),
        "bf1": jax.random.uniform(ks[5], (L, H), jnp.float32, -bound, bound),
        "wf2": jax.random.uniform(ks[6], (L, H, H), jnp.float32, -bound, bound),
        "bf2": jax.random.uniform(ks[7], (L, H), jnp.float32, -bound, bound),
    }


if __name__ == "__main__":
    hidden_dim, layers = 32, 3
    batch, seq = 2, 8

    key = jax.random.PRNGKey(0)
    k_x, k_p = jax.random.split(key)
    x = jax.random.normal(k_x, (batch, seq, hidden_dim), jnp.float32)
    params = init_params(k_p, hidden_dim, layers)

    # Primary path (weights resident in VMEM for this config).
    out = jax.block_until_ready(mepa_forward(x, params))
    assert out.shape == (batch, seq, hidden_dim)
    assert bool(jnp.all(jnp.isfinite(out)))

    # Tight structural check: same folded/bf16 weights and cast points as the kernel.
    HP = _round_up(hidden_dim, 128)
    prepped = prepare_params(params, hidden_dim, HP)
    ref_matched = mepa_reference_prepped(x, prepped, hidden_dim, HP)
    assert jnp.allclose(out, ref_matched, atol=2e-3, rtol=2e-3), \
        "mismatch vs matched-precision reference (resident path)"

    # Loose semantic check vs the original full-f32 formulation (bf16 weights).
    ref_f32 = mepa_reference(x, params)
    assert jnp.allclose(out, ref_f32, atol=1e-1, rtol=1e-1), "mismatch vs f32 reference"

    # Also exercise the streamed (per-layer grid) fallback path on TPU.
    out_s = jax.block_until_ready(mepa_forward(x, params, force_streamed=True))
    assert jnp.allclose(out_s, ref_matched, atol=2e-3, rtol=2e-3), \
        "mismatch vs matched-precision reference (streamed path)"

    print("KERNEL_OK")
</pallas_src>

<mosaic_0001>
module attributes {stable_mosaic.version = 11 : i64} {
  func.func @mepa_resident_kernel(%arg0: i32, %arg1: memref<16x128xf32, #tpu.memory_space<vmem>>, %arg2: memref<3x128x128xbf16, #tpu.memory_space<vmem>>, %arg3: memref<3x128x128xbf16, #tpu.memory_space<vmem>>, %arg4: memref<3x128x128xbf16, #tpu.memory_space<vmem>>, %arg5: memref<3x8x128xf32, #tpu.memory_space<vmem>>, %arg6: memref<16x128xf32, #tpu.memory_space<vmem>>) attributes {dimension_semantics = [#tpu.dimension_semantics<parallel>], iteration_bounds = array<i64: 1>, scalar_prefetch = 0 : i64, scratch_operands = 0 : i64, tpu.core_type = #tpu.core_type<tc>, window_params = [{transform_indices = @transform_0, window_bounds = array<i64: 16, 128>}, {pipeline_mode = #tpu.pipeline_mode<synchronous>, transform_indices = @transform_1, window_bounds = array<i64: 3, 128, 128>}, {pipeline_mode = #tpu.pipeline_mode<synchronous>, transform_indices = @transform_2, window_bounds = array<i64: 3, 128, 128>}, {pipeline_mode = #tpu.pipeline_mode<synchronous>, transform_indices = @transform_3, window_bounds = array<i64: 3, 128, 128>}, {pipeline_mode = #tpu.pipeline_mode<synchronous>, transform_indices = @transform_4, window_bounds = array<i64: 3, 8, 128>}, {transform_indices = @transform_5, window_bounds = array<i64: 16, 128>}]} {
    %c0 = arith.constant 0 : index
    %c0_0 = arith.constant 0 : index
    %0 = vector.load %arg1[%c0, %c0_0] : memref<16x128xf32, #tpu.memory_space<vmem>>, vector<16x128xf32>
    %c0_1 = arith.constant 0 : index
    %c0_2 = arith.constant 0 : index
    %c0_3 = arith.constant 0 : index
    %1 = vector.load %arg2[%c0_1, %c0_2, %c0_3] : memref<3x128x128xbf16, #tpu.memory_space<vmem>>, vector<1x128x128xbf16>
    %2 = vector.shape_cast %1 : vector<1x128x128xbf16> to vector<128x128xbf16>
    %c0_4 = arith.constant 0 : index
    %c0_5 = arith.constant 0 : index
    %c0_6 = arith.constant 0 : index
    %3 = vector.load %arg3[%c0_4, %c0_5, %c0_6] : memref<3x128x128xbf16, #tpu.memory_space<vmem>>, vector<1x128x128xbf16>
    %4 = vector.shape_cast %3 : vector<1x128x128xbf16> to vector<128x128xbf16>
    %c0_7 = arith.constant 0 : index
    %c0_8 = arith.constant 0 : index
    %c0_9 = arith.constant 0 : index
    %5 = vector.load %arg4[%c0_7, %c0_8, %c0_9] : memref<3x128x128xbf16, #tpu.memory_space<vmem>>, vector<1x128x128xbf16>
    %6 = vector.shape_cast %5 : vector<1x128x128xbf16> to vector<128x128xbf16>
    %c0_10 = arith.constant 0 : index
    %c0_11 = arith.constant 0 : index
    %c0_12 = arith.constant 0 : index
    %7 = vector.load %arg5[%c0_10, %c0_11, %c0_12] : memref<3x8x128xf32, #tpu.memory_space<vmem>>, vector<1x8x128xf32>
    %8 = vector.shape_cast %7 : vector<1x8x128xf32> to vector<8x128xf32>
    %9 = vector.extract_strided_slice %8 {offsets = [0, 0], sizes = [1, 128], strides = [1, 1]} : vector<8x128xf32> to vector<1x128xf32>
    %10 = vector.extract_strided_slice %8 {offsets = [1, 0], sizes = [1, 128], strides = [1, 1]} : vector<8x128xf32> to vector<1x128xf32>
    %11 = vector.extract_strided_slice %8 {offsets = [2, 0], sizes = [1, 128], strides = [1, 1]} : vector<8x128xf32> to vector<1x128xf32>
    %12 = vector.extract_strided_slice %8 {offsets = [3, 0], sizes = [1, 128], strides = [1, 1]} : vector<8x128xf32> to vector<1x128xf32>
    %13 = vector.extract_strided_slice %8 {offsets = [4, 0], sizes = [1, 128], strides = [1, 1]} : vector<8x128xf32> to vector<1x128xf32>
    %14 = vector.extract_strided_slice %8 {offsets = [5, 0], sizes = [1, 128], strides = [1, 1]} : vector<8x128xf32> to vector<1x128xf32>
    %15 = vector.extract_strided_slice %8 {offsets = [6, 0], sizes = [1, 128], strides = [1, 1]} : vector<8x128xf32> to vector<1x128xf32>
    %16 = arith.truncf %0 : vector<16x128xf32> to vector<16x128xbf16>
    %cst = arith.constant dense<0.000000e+00> : vector<16x128xf32>
    %17 = tpu.matmul %16, %2, %cst {dimension_numbers = #tpu.dot_dimension_numbers<[1], [0], [0], [1], [0, 0, 1, 1], [], []>} : vector<16x128xbf16>, vector<128x128xbf16>, vector<16x128xf32> -> vector<16x128xf32>
    %18 = vector.broadcast %9 : vector<1x128xf32> to vector<16x128xf32>
    %19 = arith.addf %17, %18 : vector<16x128xf32>
    %cst_13 = arith.constant dense<0.000000e+00> : vector<16xf32>
    %20 = vector.multi_reduction <add>, %19, %cst_13 [1] : vector<16x128xf32> to vector<16xf32>
    %21 = vector.shape_cast %20 : vector<16xf32> to vector<16x1xf32>
    %22 = arith.mulf %19, %19 : vector<16x128xf32>
    %cst_14 = arith.constant dense<0.000000e+00> : vector<16xf32>
    %23 = vector.multi_reduction <add>, %22, %cst_14 [1] : vector<16x128xf32> to vector<16xf32>
    %24 = vector.shape_cast %23 : vector<16xf32> to vector<16x1xf32>
    %cst_15 = arith.constant 3.125000e-02 : f32
    %25 = vector.broadcast %cst_15 : f32 to vector<16x1xf32>
    %26 = arith.mulf %21, %25 : vector<16x1xf32>
    %cst_16 = arith.constant 3.125000e-02 : f32
    %27 = vector.broadcast %cst_16 : f32 to vector<16x1xf32>
    %28 = arith.mulf %24, %27 : vector<16x1xf32>
    %29 = arith.mulf %26, %26 : vector<16x1xf32>
    %30 = arith.subf %28, %29 : vector<16x1xf32>
    %cst_17 = arith.constant 0.000000e+00 : f32
    %31 = vector.broadcast %cst_17 : f32 to vector<16x1xf32>
    %32 = arith.maximumf %30, %31 : vector<16x1xf32>
    %33 = vector.broadcast %26 : vector<16x1xf32> to vector<16x128xf32>
    %34 = arith.subf %19, %33 : vector<16x128xf32>
    %cst_18 = arith.constant 9.99999974E-6 : f32
    %35 = vector.broadcast %cst_18 : f32 to vector<16x1xf32>
    %36 = arith.addf %32, %35 : vector<16x1xf32>
    %37 = math.rsqrt %36 : vector<16x1xf32>
    %38 = vector.broadcast %37 : vector<16x1xf32> to vector<16x128xf32>
    %39 = arith.mulf %34, %38 : vector<16x128xf32>
    %40 = vector.broadcast %10 : vector<1x128xf32> to vector<16x128xf32>
    %41 = arith.mulf %39, %40 : vector<16x128xf32>
    %42 = vector.broadcast %11 : vector<1x128xf32> to vector<16x128xf32>
    %43 = arith.addf %41, %42 : vector<16x128xf32>
    %cst_19 = arith.constant dense<0.000000e+00> : vector<16xf32>
    %44 = vector.multi_reduction <add>, %43, %cst_19 [1] : vector<16x128xf32> to vector<16xf32>
    %45 = vector.shape_cast %44 : vector<16xf32> to vector<16x1xf32>
    %46 = arith.mulf %43, %43 : vector<16x128xf32>
    %cst_20 = arith.constant dense<0.000000e+00> : vector<16xf32>
    %47 = vector.multi_reduction <add>, %46, %cst_20 [1] : vector<16x128xf32> to vector<16xf32>
    %48 = vector.shape_cast %47 : vector<16xf32> to vector<16x1xf32>
    %cst_21 = arith.constant 3.125000e-02 : f32
    %49 = vector.broadcast %cst_21 : f32 to vector<16x1xf32>
    %50 = arith.mulf %45, %49 : vector<16x1xf32>
    %cst_22 = arith.constant 3.125000e-02 : f32
    %51 = vector.broadcast %cst_22 : f32 to vector<16x1xf32>
    %52 = arith.mulf %48, %51 : vector<16x1xf32>
    %53 = arith.mulf %50, %50 : vector<16x1xf32>
    %54 = arith.subf %52, %53 : vector<16x1xf32>
    %cst_23 = arith.constant 0.000000e+00 : f32
    %55 = vector.broadcast %cst_23 : f32 to vector<16x1xf32>
    %56 = arith.maximumf %54, %55 : vector<16x1xf32>
    %57 = vector.broadcast %50 : vector<16x1xf32> to vector<16x128xf32>
    %58 = arith.subf %43, %57 : vector<16x128xf32>
    %cst_24 = arith.constant 9.99999974E-6 : f32
    %59 = vector.broadcast %cst_24 : f32 to vector<16x1xf32>
    %60 = arith.addf %56, %59 : vector<16x1xf32>
    %61 = math.rsqrt %60 : vector<16x1xf32>
    %62 = vector.broadcast %61 : vector<16x1xf32> to vector<16x128xf32>
    %63 = arith.mulf %58, %62 : vector<16x128xf32>
    %64 = vector.broadcast %12 : vector<1x128xf32> to vector<16x128xf32>
    %65 = arith.mulf %63, %64 : vector<16x128xf32>
    %66 = vector.broadcast %13 : vector<1x128xf32> to vector<16x128xf32>
    %67 = arith.addf %65, %66 : vector<16x128xf32>
    %68 = arith.truncf %67 : vector<16x128xf32> to vector<16x128xbf16>
    %cst_25 = arith.constant dense<0.000000e+00> : vector<16x128xf32>
    %69 = tpu.matmul %68, %4, %cst_25 {dimension_numbers = #tpu.dot_dimension_numbers<[1], [0], [0], [1], [0, 0, 1, 1], [], []>} : vector<16x128xbf16>, vector<128x128xbf16>, vector<16x128xf32> -> vector<16x128xf32>
    %70 = vector.broadcast %14 : vector<1x128xf32> to vector<16x128xf32>
    %71 = arith.addf %69, %70 : vector<16x128xf32>
    %cst_26 = arith.constant 0.000000e+00 : f32
    %72 = vector.broadcast %cst_26 : f32 to vector<16x128xf32>
    %73 = arith.maximumf %71, %72 : vector<16x128xf32>
    %74 = arith.truncf %73 : vector<16x128xf32> to vector<16x128xbf16>
    %cst_27 = arith.constant dense<0.000000e+00> : vector<16x128xf32>
    %75 = tpu.matmul %74, %6, %cst_27 {dimension_numbers = #tpu.dot_dimension_numbers<[1], [0], [0], [1], [0, 0, 1, 1], [], []>} : vector<16x128xbf16>, vector<128x128xbf16>, vector<16x128xf32> -> vector<16x128xf32>
    %76 = vector.broadcast %15 : vector<1x128xf32> to vector<16x128xf32>
    %77 = arith.addf %75, %76 : vector<16x128xf32>
    %78 = arith.addf %77, %43 : vector<16x128xf32>
    %c1 = arith.constant 1 : index
    %c0_28 = arith.constant 0 : index
    %c0_29 = arith.constant 0 : index
    %79 = vector.load %arg2[%c1, %c0_28, %c0_29] : memref<3x128x128xbf16, #tpu.memory_space<vmem>>, vector<1x128x128xbf16>
    %80 = vector.shape_cast %79 : vector<1x128x128xbf16> to vector<128x128xbf16>
    %c1_30 = arith.constant 1 : index
    %c0_31 = arith.constant 0 : index
    %c0_32 = arith.constant 0 : index
    %81 = vector.load %arg3[%c1_30, %c0_31, %c0_32] : memref<3x128x128xbf16, #tpu.memory_space<vmem>>, vector<1x128x128xbf16>
    %82 = vector.shape_cast %81 : vector<1x128x128xbf16> to vector<128x128xbf16>
    %c1_33 = arith.constant 1 : index
    %c0_34 = arith.constant 0 : index
    %c0_35 = arith.constant 0 : index
    %83 = vector.load %arg4[%c1_33, %c0_34, %c0_35] : memref<3x128x128xbf16, #tpu.memory_space<vmem>>, vector<1x128x128xbf16>
    %84 = vector.shape_cast %83 : vector<1x128x128xbf16> to vector<128x128xbf16>
    %c1_36 = arith.constant 1 : index
    %c0_37 = arith.constant 0 : index
    %c0_38 = arith.constant 0 : index
    %85 = vector.load %arg5[%c1_36, %c0_37, %c0_38] : memref<3x8x128xf32, #tpu.memory_space<vmem>>, vector<1x8x128xf32>
    %86 = vector.shape_cast %85 : vector<1x8x128xf32> to vector<8x128xf32>
    %87 = vector.extract_strided_slice %86 {offsets = [0, 0], sizes = [1, 128], strides = [1, 1]} : vector<8x128xf32> to vector<1x128xf32>
    %88 = vector.extract_strided_slice %86 {offsets = [1, 0], sizes = [1, 128], strides = [1, 1]} : vector<8x128xf32> to vector<1x128xf32>
    %89 = vector.extract_strided_slice %86 {offsets = [2, 0], sizes = [1, 128], strides = [1, 1]} : vector<8x128xf32> to vector<1x128xf32>
    %90 = vector.extract_strided_slice %86 {offsets = [3, 0], sizes = [1, 128], strides = [1, 1]} : vector<8x128xf32> to vector<1x128xf32>
    %91 = vector.extract_strided_slice %86 {offsets = [4, 0], sizes = [1, 128], strides = [1, 1]} : vector<8x128xf32> to vector<1x128xf32>
    %92 = vector.extract_strided_slice %86 {offsets = [5, 0], sizes = [1, 128], strides = [1, 1]} : vector<8x128xf32> to vector<1x128xf32>
    %93 = vector.extract_strided_slice %86 {offsets = [6, 0], sizes = [1, 128], strides = [1, 1]} : vector<8x128xf32> to vector<1x128xf32>
    %94 = arith.truncf %78 : vector<16x128xf32> to vector<16x128xbf16>
    %cst_39 = arith.constant dense<0.000000e+00> : vector<16x128xf32>
    %95 = tpu.matmul %94, %80, %cst_39 {dimension_numbers = #tpu.dot_dimension_numbers<[1], [0], [0], [1], [0, 0, 1, 1], [], []>} : vector<16x128xbf16>, vector<128x128xbf16>, vector<16x128xf32> -> vector<16x128xf32>
    %96 = vector.broadcast %87 : vector<1x128xf32> to vector<16x128xf32>
    %97 = arith.addf %95, %96 : vector<16x128xf32>
    %cst_40 = arith.constant dense<0.000000e+00> : vector<16xf32>
    %98 = vector.multi_reduction <add>, %97, %cst_40 [1] : vector<16x128xf32> to vector<16xf32>
    %99 = vector.shape_cast %98 : vector<16xf32> to vector<16x1xf32>
    %100 = arith.mulf %97, %97 : vector<16x128xf32>
    %cst_41 = arith.constant dense<0.000000e+00> : vector<16xf32>
    %101 = vector.multi_reduction <add>, %100, %cst_41 [1] : vector<16x128xf32> to vector<16xf32>
    %102 = vector.shape_cast %101 : vector<16xf32> to vector<16x1xf32>
    %cst_42 = arith.constant 3.125000e-02 : f32
    %103 = vector.broadcast %cst_42 : f32 to vector<16x1xf32>
    %104 = arith.mulf %99, %103 : vector<16x1xf32>
    %cst_43 = arith.constant 3.125000e-02 : f32
    %105 = vector.broadcast %cst_43 : f32 to vector<16x1xf32>
    %106 = arith.mulf %102, %105 : vector<16x1xf32>
    %107 = arith.mulf %104, %104 : vector<16x1xf32>
    %108 = arith.subf %106, %107 : vector<16x1xf32>
    %cst_44 = arith.constant 0.000000e+00 : f32
    %109 = vector.broadcast %cst_44 : f32 to vector<16x1xf32>
    %110 = arith.maximumf %108, %109 : vector<16x1xf32>
    %111 = vector.broadcast %104 : vector<16x1xf32> to vector<16x128xf32>
    %112 = arith.subf %97, %111 : vector<16x128xf32>
    %cst_45 = arith.constant 9.99999974E-6 : f32
    %113 = vector.broadcast %cst_45 : f32 to vector<16x1xf32>
    %114 = arith.addf %110, %113 : vector<16x1xf32>
    %115 = math.rsqrt %114 : vector<16x1xf32>
    %116 = vector.broadcast %115 : vector<16x1xf32> to vector<16x128xf32>
    %117 = arith.mulf %112, %116 : vector<16x128xf32>
    %118 = vector.broadcast %88 : vector<1x128xf32> to vector<16x128xf32>
    %119 = arith.mulf %117, %118 : vector<16x128xf32>
    %120 = vector.broadcast %89 : vector<1x128xf32> to vector<16x128xf32>
    %121 = arith.addf %119, %120 : vector<16x128xf32>
    %cst_46 = arith.constant dense<0.000000e+00> : vector<16xf32>
    %122 = vector.multi_reduction <add>, %121, %cst_46 [1] : vector<16x128xf32> to vector<16xf32>
    %123 = vector.shape_cast %122 : vector<16xf32> to vector<16x1xf32>
    %124 = arith.mulf %121, %121 : vector<16x128xf32>
    %cst_47 = arith.constant dense<0.000000e+00> : vector<16xf32>
    %125 = vector.multi_reduction <add>, %124, %cst_47 [1] : vector<16x128xf32> to vector<16xf32>
    %126 = vector.shape_cast %125 : vector<16xf32> to vector<16x1xf32>
    %cst_48 = arith.constant 3.125000e-02 : f32
    %127 = vector.broadcast %cst_48 : f32 to vector<16x1xf32>
    %128 = arith.mulf %123, %127 : vector<16x1xf32>
    %cst_49 = arith.constant 3.125000e-02 : f32
    %129 = vector.broadcast %cst_49 : f32 to vector<16x1xf32>
    %130 = arith.mulf %126, %129 : vector<16x1xf32>
    %131 = arith.mulf %128, %128 : vector<16x1xf32>
    %132 = arith.subf %130, %131 : vector<16x1xf32>
    %cst_50 = arith.constant 0.000000e+00 : f32
    %133 = vector.broadcast %cst_50 : f32 to vector<16x1xf32>
    %134 = arith.maximumf %132, %133 : vector<16x1xf32>
    %135 = vector.broadcast %128 : vector<16x1xf32> to vector<16x128xf32>
    %136 = arith.subf %121, %135 : vector<16x128xf32>
    %cst_51 = arith.constant 9.99999974E-6 : f32
    %137 = vector.broadcast %cst_51 : f32 to vector<16x1xf32>
    %138 = arith.addf %134, %137 : vector<16x1xf32>
    %139 = math.rsqrt %138 : vector<16x1xf32>
    %140 = vector.broadcast %139 : vector<16x1xf32> to vector<16x128xf32>
    %141 = arith.mulf %136, %140 : vector<16x128xf32>
    %142 = vector.broadcast %90 : vector<1x128xf32> to vector<16x128xf32>
    %143 = arith.mulf %141, %142 : vector<16x128xf32>
    %144 = vector.broadcast %91 : vector<1x128xf32> to vector<16x128xf32>
    %145 = arith.addf %143, %144 : vector<16x128xf32>
    %146 = arith.truncf %145 : vector<16x128xf32> to vector<16x128xbf16>
    %cst_52 = arith.constant dense<0.000000e+00> : vector<16x128xf32>
    %147 = tpu.matmul %146, %82, %cst_52 {dimension_numbers = #tpu.dot_dimension_numbers<[1], [0], [0], [1], [0, 0, 1, 1], [], []>} : vector<16x128xbf16>, vector<128x128xbf16>, vector<16x128xf32> -> vector<16x128xf32>
    %148 = vector.broadcast %92 : vector<1x128xf32> to vector<16x128xf32>
    %149 = arith.addf %147, %148 : vector<16x128xf32>
    %cst_53 = arith.constant 0.000000e+00 : f32
    %150 = vector.broadcast %cst_53 : f32 to vector<16x128xf32>
    %151 = arith.maximumf %149, %150 : vector<16x128xf32>
    %152 = arith.truncf %151 : vector<16x128xf32> to vector<16x128xbf16>
    %cst_54 = arith.constant dense<0.000000e+00> : vector<16x128xf32>
    %153 = tpu.matmul %152, %84, %cst_54 {dimension_numbers = #tpu.dot_dimension_numbers<[1], [0], [0], [1], [0, 0, 1, 1], [], []>} : vector<16x128xbf16>, vector<128x128xbf16>, vector<16x128xf32> -> vector<16x128xf32>
    %154 = vector.broadcast %93 : vector<1x128xf32> to vector<16x128xf32>
    %155 = arith.addf %153, %154 : vector<16x128xf32>
    %156 = arith.addf %155, %121 : vector<16x128xf32>
    %c2 = arith.constant 2 : index
    %c0_55 = arith.constant 0 : index
    %c0_56 = arith.constant 0 : index
    %157 = vector.load %arg2[%c2, %c0_55, %c0_56] : memref<3x128x128xbf16, #tpu.memory_space<vmem>>, vector<1x128x128xbf16>
    %158 = vector.shape_cast %157 : vector<1x128x128xbf16> to vector<128x128xbf16>
    %c2_57 = arith.constant 2 : index
    %c0_58 = arith.constant 0 : index
    %c0_59 = arith.constant 0 : index
    %159 = vector.load %arg3[%c2_57, %c0_58, %c0_59] : memref<3x128x128xbf16, #tpu.memory_space<vmem>>, vector<1x128x128xbf16>
    %160 = vector.shape_cast %159 : vector<1x128x128xbf16> to vector<128x128xbf16>
    %c2_60 = arith.constant 2 : index
    %c0_61 = arith.constant 0 : index
    %c0_62 = arith.constant 0 : index
    %161 = vector.load %arg4[%c2_60, %c0_61, %c0_62] : memref<3x128x128xbf16, #tpu.memory_space<vmem>>, vector<1x128x128xbf16>
    %162 = vector.shape_cast %161 : vector<1x128x128xbf16> to vector<128x128xbf16>
    %c2_63 = arith.constant 2 : index
    %c0_64 = arith.constant 0 : index
    %c0_65 = arith.constant 0 : index
    %163 = vector.load %arg5[%c2_63, %c0_64, %c0_65] : memref<3x8x128xf32, #tpu.memory_space<vmem>>, vector<1x8x128xf32>
    %164 = vector.shape_cast %163 : vector<1x8x128xf32> to vector<8x128xf32>
    %165 = vector.extract_strided_slice %164 {offsets = [0, 0], sizes = [1, 128], strides = [1, 1]} : vector<8x128xf32> to vector<1x128xf32>
    %166 = vector.extract_strided_slice %164 {offsets = [1, 0], sizes = [1, 128], strides = [1, 1]} : vector<8x128xf32> to vector<1x128xf32>
    %167 = vector.extract_strided_slice %164 {offsets = [2, 0], sizes = [1, 128], strides = [1, 1]} : vector<8x128xf32> to vector<1x128xf32>
    %168 = vector.extract_strided_slice %164 {offsets = [3, 0], sizes = [1, 128], strides = [1, 1]} : vector<8x128xf32> to vector<1x128xf32>
    %169 = vector.extract_strided_slice %164 {offsets = [4, 0], sizes = [1, 128], strides = [1, 1]} : vector<8x128xf32> to vector<1x128xf32>
    %170 = vector.extract_strided_slice %164 {offsets = [5, 0], sizes = [1, 128], strides = [1, 1]} : vector<8x128xf32> to vector<1x128xf32>
    %171 = vector.extract_strided_slice %164 {offsets = [6, 0], sizes = [1, 128], strides = [1, 1]} : vector<8x128xf32> to vector<1x128xf32>
    %172 = arith.truncf %156 : vector<16x128xf32> to vector<16x128xbf16>
    %cst_66 = arith.constant dense<0.000000e+00> : vector<16x128xf32>
    %173 = tpu.matmul %172, %158, %cst_66 {dimension_numbers = #tpu.dot_dimension_numbers<[1], [0], [0], [1], [0, 0, 1, 1], [], []>} : vector<16x128xbf16>, vector<128x128xbf16>, vector<16x128xf32> -> vector<16x128xf32>
    %174 = vector.broadcast %165 : vector<1x128xf32> to vector<16x128xf32>
    %175 = arith.addf %173, %174 : vector<16x128xf32>
    %cst_67 = arith.constant dense<0.000000e+00> : vector<16xf32>
    %176 = vector.multi_reduction <add>, %175, %cst_67 [1] : vector<16x128xf32> to vector<16xf32>
    %177 = vector.shape_cast %176 : vector<16xf32> to vector<16x1xf32>
    %178 = arith.mulf %175, %175 : vector<16x128xf32>
    %cst_68 = arith.constant dense<0.000000e+00> : vector<16xf32>
    %179 = vector.multi_reduction <add>, %178, %cst_68 [1] : vector<16x128xf32> to vector<16xf32>
    %180 = vector.shape_cast %179 : vector<16xf32> to vector<16x1xf32>
    %cst_69 = arith.constant 3.125000e-02 : f32
    %181 = vector.broadcast %cst_69 : f32 to vector<16x1xf32>
    %182 = arith.mulf %177, %181 : vector<16x1xf32>
    %cst_70 = arith.constant 3.125000e-02 : f32
    %183 = vector.broadcast %cst_70 : f32 to vector<16x1xf32>
    %184 = arith.mulf %180, %183 : vector<16x1xf32>
    %185 = arith.mulf %182, %182 : vector<16x1xf32>
    %186 = arith.subf %184, %185 : vector<16x1xf32>
    %cst_71 = arith.constant 0.000000e+00 : f32
    %187 = vector.broadcast %cst_71 : f32 to vector<16x1xf32>
    %188 = arith.maximumf %186, %187 : vector<16x1xf32>
    %189 = vector.broadcast %182 : vector<16x1xf32> to vector<16x128xf32>
    %190 = arith.subf %175, %189 : vector<16x128xf32>
    %cst_72 = arith.constant 9.99999974E-6 : f32
    %191 = vector.broadcast %cst_72 : f32 to vector<16x1xf32>
    %192 = arith.addf %188, %191 : vector<16x1xf32>
    %193 = math.rsqrt %192 : vector<16x1xf32>
    %194 = vector.broadcast %193 : vector<16x1xf32> to vector<16x128xf32>
    %195 = arith.mulf %190, %194 : vector<16x128xf32>
    %196 = vector.broadcast %166 : vector<1x128xf32> to vector<16x128xf32>
    %197 = arith.mulf %195, %196 : vector<16x128xf32>
    %198 = vector.broadcast %167 : vector<1x128xf32> to vector<16x128xf32>
    %199 = arith.addf %197, %198 : vector<16x128xf32>
    %cst_73 = arith.constant dense<0.000000e+00> : vector<16xf32>
    %200 = vector.multi_reduction <add>, %199, %cst_73 [1] : vector<16x128xf32> to vector<16xf32>
    %201 = vector.shape_cast %200 : vector<16xf32> to vector<16x1xf32>
    %202 = arith.mulf %199, %199 : vector<16x128xf32>
    %cst_74 = arith.constant dense<0.000000e+00> : vector<16xf32>
    %203 = vector.multi_reduction <add>, %202, %cst_74 [1] : vector<16x128xf32> to vector<16xf32>
    %204 = vector.shape_cast %203 : vector<16xf32> to vector<16x1xf32>
    %cst_75 = arith.constant 3.125000e-02 : f32
    %205 = vector.broadcast %cst_75 : f32 to vector<16x1xf32>
    %206 = arith.mulf %201, %205 : vector<16x1xf32>
    %cst_76 = arith.constant 3.125000e-02 : f32
    %207 = vector.broadcast %cst_76 : f32 to vector<16x1xf32>
    %208 = arith.mulf %204, %207 : vector<16x1xf32>
    %209 = arith.mulf %206, %206 : vector<16x1xf32>
    %210 = arith.subf %208, %209 : vector<16x1xf32>
    %cst_77 = arith.constant 0.000000e+00 : f32
    %211 = vector.broadcast %cst_77 : f32 to vector<16x1xf32>
    %212 = arith.maximumf %210, %211 : vector<16x1xf32>
    %213 = vector.broadcast %206 : vector<16x1xf32> to vector<16x128xf32>
    %214 = arith.subf %199, %213 : vector<16x128xf32>
    %cst_78 = arith.constant 9.99999974E-6 : f32
    %215 = vector.broadcast %cst_78 : f32 to vector<16x1xf32>
    %216 = arith.addf %212, %215 : vector<16x1xf32>
    %217 = math.rsqrt %216 : vector<16x1xf32>
    %218 = vector.broadcast %217 : vector<16x1xf32> to vector<16x128xf32>
    %219 = arith.mulf %214, %218 : vector<16x128xf32>
    %220 = vector.broadcast %168 : vector<1x128xf32> to vector<16x128xf32>
    %221 = arith.mulf %219, %220 : vector<16x128xf32>
    %222 = vector.broadcast %169 : vector<1x128xf32> to vector<16x128xf32>
    %223 = arith.addf %221, %222 : vector<16x128xf32>
    %224 = arith.truncf %223 : vector<16x128xf32> to vector<16x128xbf16>
    %cst_79 = arith.constant dense<0.000000e+00> : vector<16x128xf32>
    %225 = tpu.matmul %224, %160, %cst_79 {dimension_numbers = #tpu.dot_dimension_numbers<[1], [0], [0], [1], [0, 0, 1, 1], [], []>} : vector<16x128xbf16>, vector<128x128xbf16>, vector<16x128xf32> -> vector<16x128xf32>
    %226 = vector.broadcast %170 : vector<1x128xf32> to vector<16x128xf32>
    %227 = arith.addf %225, %226 : vector<16x128xf32>
    %cst_80 = arith.constant 0.000000e+00 : f32
    %228 = vector.broadcast %cst_80 : f32 to vector<16x128xf32>
    %229 = arith.maximumf %227, %228 : vector<16x128xf32>
    %230 = arith.truncf %229 : vector<16x128xf32> to vector<16x128xbf16>
    %cst_81 = arith.constant dense<0.000000e+00> : vector<16x128xf32>
    %231 = tpu.matmul %230, %162, %cst_81 {dimension_numbers = #tpu.dot_dimension_numbers<[1], [0], [0], [1], [0, 0, 1, 1], [], []>} : vector<16x128xbf16>, vector<128x128xbf16>, vector<16x128xf32> -> vector<16x128xf32>
    %232 = vector.broadcast %171 : vector<1x128xf32> to vector<16x128xf32>
    %233 = arith.addf %231, %232 : vector<16x128xf32>
    %234 = arith.addf %233, %199 : vector<16x128xf32>
    %c0_82 = arith.constant 0 : index
    %c0_83 = arith.constant 0 : index
    %235 = vector.load %arg6[%c0_82, %c0_83] : memref<16x128xf32, #tpu.memory_space<vmem>>, vector<16x128xf32>
    tpu.vector_store %arg6[%c0_82, %c0_83], %234 {strides = array<i32>} : memref<16x128xf32, #tpu.memory_space<vmem>>, vector<16x128xf32>,
    return
  }
  func.func @transform_0(%arg0: i32) -> (i32, i32) {
    %c0_i32 = arith.constant 0 : i32
    %c0_i32_0 = arith.constant 0 : i32
    return %arg0, %c0_i32 : i32, i32
  }
  func.func @transform_1(%arg0: i32) -> (i32, i32, i32) {
    %c0_i32 = arith.constant 0 : i32
    %c0_i32_0 = arith.constant 0 : i32
    %c0_i32_1 = arith.constant 0 : i32
    %c0_i32_2 = arith.constant 0 : i32
    return %c0_i32, %c0_i32_0, %c0_i32_1 : i32, i32, i32
  }
  func.func @transform_2(%arg0: i32) -> (i32, i32, i32) {
    %c0_i32 = arith.constant 0 : i32
    %c0_i32_0 = arith.constant 0 : i32
    %c0_i32_1 = arith.constant 0 : i32
    %c0_i32_2 = arith.constant 0 : i32
    return %c0_i32, %c0_i32_0, %c0_i32_1 : i32, i32, i32
  }
  func.func @transform_3(%arg0: i32) -> (i32, i32, i32) {
    %c0_i32 = arith.constant 0 : i32
    %c0_i32_0 = arith.constant 0 : i32
    %c0_i32_1 = arith.constant 0 : i32
    %c0_i32_2 = arith.constant 0 : i32
    return %c0_i32, %c0_i32_0, %c0_i32_1 : i32, i32, i32
  }
  func.func @transform_4(%arg0: i32) -> (i32, i32, i32) {
    %c0_i32 = arith.constant 0 : i32
    %c0_i32_0 = arith.constant 0 : i32
    %c0_i32_1 = arith.constant 0 : i32
    %c0_i32_2 = arith.constant 0 : i32
    return %c0_i32, %c0_i32_0, %c0_i32_1 : i32, i32, i32
  }
  func.func @transform_5(%arg0: i32) -> (i32, i32) {
    %c0_i32 = arith.constant 0 : i32
    %c0_i32_0 = arith.constant 0 : i32
    return %arg0, %c0_i32 : i32, i32
  }
}

</mosaic_0001>

<llo_original>
// kernel: tpu_custom_call.1
$region0: #{tpu_custom_call.1}
  #allocation0 [shape = 'u32[]', space=smem, size = 0x4, offset = 0x4, fixed_abs, tag = 'smem constant byte address 0x4 - core index']
  #allocation1 [shape = 'u32[144,128]{1,0:T(1,128)}', space=vmem, size = 0x12000, scoped, tag = 'internal scratch']
  %s0 = inlined_call_operand.hbm [shape: f32[16,128], index: 0, kind: input, shape index: {}]
  %s1 = inlined_call_operand.hbm [shape: bf16[3,128,128], index: 1, kind: input, shape index: {}]
  %s2 = inlined_call_operand.hbm [shape: bf16[3,128,128], index: 2, kind: input, shape index: {}]
  %s3 = inlined_call_operand.hbm [shape: bf16[3,128,128], index: 3, kind: input, shape index: {}]
  %s4 = inlined_call_operand.hbm [shape: f32[3,8,128], index: 4, kind: input, shape index: {}]
  %s5 = inlined_call_operand.hbm [shape: f32[16,128], index: 5, kind: output, shape index: {}]
  %s6 = sld [smem:[#allocation0]]
  $region50: #{tpu_custom_call.1} parent=0
    _
  %s8 = ssub.s32 1, %s6
  %s9 = scalar_select 0, %s8, %s6
  $region1: #{tpu_custom_call.1} parent=0
    #allocation2 [shape = 'u8[8192]{0}', space=vmem, size = 0x2000, scoped, tag = 'input window, operand 0, single buffered']
    #allocation3 [shape = 's32[1]{0}', space=sflag, size = 0x4, scoped, tag = 'scoped memory for tpu_custom_call.1']
    #allocation4 [shape = 's32[1]{0}', space=sflag, size = 0x4, scoped, tag = 'scoped memory for tpu_custom_call.1']
    #allocation5 [shape = 'u8[98304]{0}', space=vmem, size = 0x18000, scoped, tag = 'input window, operand 1, single buffered']
    #allocation6 [shape = 's32[1]{0}', space=sflag, size = 0x4, scoped, tag = 'scoped memory for tpu_custom_call.1']
    #allocation7 [shape = 'u8[98304]{0}', space=vmem, size = 0x18000, scoped, tag = 'input window, operand 2, single buffered']
    #allocation8 [shape = 'u8[98304]{0}', space=vmem, size = 0x18000, scoped, tag = 'input window, operand 3, single buffered']
    #allocation9 [shape = 's32[1]{0}', space=sflag, size = 0x4, scoped, tag = 'scoped memory for tpu_custom_call.1']
    #allocation10 [shape = 'u8[12288]{0}', space=vmem, size = 0x3000, scoped, tag = 'input window, operand 4, single buffered']
    #allocation11 [shape = 'u8[8192]{0}', space=vmem, size = 0x2000, scoped, tag = 'output window, operand 0, single buffered']
    %10 = vsyncpa [#allocation3], 0
    %11 = vsyncpa [#allocation6], 0
    %12 = vsyncpa [#allocation9], 0
    %13 = vsyncpa [#allocation4], 0
    // Predicated region
    $region2: #{tpu_custom_call.1} parent=1 // pred_check
      _
    $region3: #{tpu_custom_call.1} parent=1 // pred_check_branch
      %15 = sbr.rel (0) target = $region5
    $region4: #{tpu_custom_call.1} parent=1 // pred_region
      %s17 = ssub.s32 256, 256
      %18 = vsyncadd [#allocation3], %s17
      %s19 = sshll.u32 [#allocation2], 4
      %s20 = int_to_ptr.vmem [resolvable:$true] %s19
      %25 = dma.hbm_to_vmem [thread:$0]  %s0, 256, %s20, [#allocation3], 128, 128, 8
    $region5: #{tpu_custom_call.1} parent=1 // pred_fallthru
      _
    // Predicated region
    $region6: #{tpu_custom_call.1} parent=1 // pred_check
      _
    $region7: #{tpu_custom_call.1} parent=1 // pred_check_branch
      %27 = sbr.rel (0) target = $region9
    $region8: #{tpu_custom_call.1} parent=1 // pred_region
      %s29 = ssub.s32 3072, 3072
      %30 = vsyncadd [#allocation6], %s29
      %s31 = sshll.u32 [#allocation5], 4
      %s32 = int_to_ptr.vmem [resolvable:$true] %s31
      %37 = dma.hbm_to_vmem [thread:$0]  %s1, 3072, %s32, [#allocation6], 64, 64, 4
    $region9: #{tpu_custom_call.1} parent=1 // pred_fallthru
      _
    // Predicated region
    $region10: #{tpu_custom_call.1} parent=1 // pred_check
      _
    $region11: #{tpu_custom_call.1} parent=1 // pred_check_branch
      %39 = sbr.rel (0) target = $region13
    $region12: #{tpu_custom_call.1} parent=1 // pred_region
      %s41 = ssub.s32 3072, 3072
      %42 = vsyncadd [#allocation6], %s41
      %s43 = sshll.u32 [#allocation7], 4
      %s44 = int_to_ptr.vmem [resolvable:$true] %s43
      %49 = dma.hbm_to_vmem [thread:$0]  %s2, 3072, %s44, [#allocation6], 64, 64, 4
    $region13: #{tpu_custom_call.1} parent=1 // pred_fallthru
      _
    // Predicated region
    $region14: #{tpu_custom_call.1} parent=1 // pred_check
      _
    $region15: #{tpu_custom_call.1} parent=1 // pred_check_branch
      %51 = sbr.rel (0) target = $region17
    $region16: #{tpu_custom_call.1} parent=1 // pred_region
      %s53 = ssub.s32 3072, 3072
      %54 = vsyncadd [#allocation9], %s53
      %s55 = sshll.u32 [#allocation8], 4
      %s56 = int_to_ptr.vmem [resolvable:$true] %s55
      %61 = dma.hbm_to_vmem [thread:$0]  %s3, 3072, %s56, [#allocation9], 64, 64, 4
    $region17: #{tpu_custom_call.1} parent=1 // pred_fallthru
      _
    // Predicated region
    $region18: #{tpu_custom_call.1} parent=1 // pred_check
      _
    $region19: #{tpu_custom_call.1} parent=1 // pred_check_branch
      %63 = sbr.rel (0) target = $region21
    $region20: #{tpu_custom_call.1} parent=1 // pred_region
      %s65 = ssub.s32 384, 384
      %66 = vsyncadd [#allocation9], %s65
      %s67 = sshll.u32 [#allocation10], 4
      %s68 = int_to_ptr.vmem [resolvable:$true] %s67
      %73 = dma.hbm_to_vmem [thread:$0]  %s4, 384, %s68, [#allocation9], 128, 128, 8
    $region21: #{tpu_custom_call.1} parent=1 // pred_fallthru
      _
    // Predicated region
    $region22: #{tpu_custom_call.1} parent=1 // pred_check
      _
    $region23: #{tpu_custom_call.1} parent=1 // pred_check_branch
      %75 = sbr.rel (0) target = $region25
    $region24: #{tpu_custom_call.1} parent=1 // pred_region
      %76 = dma.done [#allocation3], 256
    $region25: #{tpu_custom_call.1} parent=1 // pred_fallthru
      _
    // Predicated region
    $region26: #{tpu_custom_call.1} parent=1 // pred_check
      _
    $region27: #{tpu_custom_call.1} parent=1 // pred_check_branch
      %78 = sbr.rel (0) target = $region29
    $region28: #{tpu_custom_call.1} parent=1 // pred_region
      %79 = dma.done [#allocation6], 3072
    $region29: #{tpu_custom_call.1} parent=1 // pred_fallthru
      _
    // Predicated region
    $region30: #{tpu_custom_call.1} parent=1 // pred_check
      _
    $region31: #{tpu_custom_call.1} parent=1 // pred_check_branch
      %81 = sbr.rel (0) target = $region33
    $region32: #{tpu_custom_call.1} parent=1 // pred_region
      %82 = dma.done [#allocation6], 3072
    $region33: #{tpu_custom_call.1} parent=1 // pred_fallthru
      _
    // Predicated region
    $region34: #{tpu_custom_call.1} parent=1 // pred_check
      _
    $region35: #{tpu_custom_call.1} parent=1 // pred_check_branch
      %84 = sbr.rel (0) target = $region37
    $region36: #{tpu_custom_call.1} parent=1 // pred_region
      %85 = dma.done [#allocation9], 3072
    $region37: #{tpu_custom_call.1} parent=1 // pred_fallthru
      _
    // Predicated region
    $region38: #{tpu_custom_call.1} parent=1 // pred_check
      _
    $region39: #{tpu_custom_call.1} parent=1 // pred_check_branch
      %87 = sbr.rel (0) target = $region41
    $region40: #{tpu_custom_call.1} parent=1 // pred_region
      %88 = dma.done [#allocation9], 384
    $region41: #{tpu_custom_call.1} parent=1 // pred_fallthru
      _
    %v90 = vld [vmem:[#allocation2] sm:$0xff]
    %v91 = vld [vmem:[#allocation2 + $0x8] sm:$0xff]
    %v92 = vld [vmem:[#allocation5] sm:$0xf]
    %v93 = vld [vmem:[#allocation5 + $0x4] sm:$0xf]
    %v94 = vld [vmem:[#allocation5 + $0x8] sm:$0xf]
    %v95 = vld [vmem:[#allocation5 + $0xc] sm:$0xf]
    %v96 = vld [vmem:[#allocation5 + $0x10] sm:$0xf]
    %v97 = vld [vmem:[#allocation5 + $0x14] sm:$0xf]
    %v98 = vld [vmem:[#allocation5 + $0x18] sm:$0xf]
    %v99 = vld [vmem:[#allocation5 + $0x1c] sm:$0xf]
    %v100 = vld [vmem:[#allocation5 + $0x20] sm:$0xf]
    %v101 = vld [vmem:[#allocation5 + $0x24] sm:$0xf]
    %v102 = vld [vmem:[#allocation5 + $0x28] sm:$0xf]
    %v103 = vld [vmem:[#allocation5 + $0x2c] sm:$0xf]
    %v104 = vld [vmem:[#allocation5 + $0x30] sm:$0xf]
    %v105 = vld [vmem:[#allocation5 + $0x34] sm:$0xf]
    %v106 = vld [vmem:[#allocation5 + $0x38] sm:$0xf]
    %v107 = vld [vmem:[#allocation5 + $0x3c] sm:$0xf]
    %v108 = vld [vmem:[#allocation7] sm:$0xf]
    %v109 = vld [vmem:[#allocation7 + $0x4] sm:$0xf]
    %v110 = vld [vmem:[#allocation7 + $0x8] sm:$0xf]
    %v111 = vld [vmem:[#allocation7 + $0xc] sm:$0xf]
    %v112 = vld [vmem:[#allocation7 + $0x10] sm:$0xf]
    %v113 = vld [vmem:[#allocation7 + $0x14] sm:$0xf]
    %v114 = vld [vmem:[#allocation7 + $0x18] sm:$0xf]
    %v115 = vld [vmem:[#allocation7 + $0x1c] sm:$0xf]
    %v116 = vld [vmem:[#allocation7 + $0x20] sm:$0xf]
    %v117 = vld [vmem:[#allocation7 + $0x24] sm:$0xf]
    %v118 = vld [vmem:[#allocation7 + $0x28] sm:$0xf]
    %v119 = vld [vmem:[#allocation7 + $0x2c] sm:$0xf]
    %v120 = vld [vmem:[#allocation7 + $0x30] sm:$0xf]
    %v121 = vld [vmem:[#allocation7 + $0x34] sm:$0xf]
    %v122 = vld [vmem:[#allocation7 + $0x38] sm:$0xf]
    %v123 = vld [vmem:[#allocation7 + $0x3c] sm:$0xf]
    %v124 = vld [vmem:[#allocation8] sm:$0xf]
    %v125 = vld [vmem:[#allocation8 + $0x4] sm:$0xf]
    %v126 = vld [vmem:[#allocation8 + $0x8] sm:$0xf]
    %v127 = vld [vmem:[#allocation8 + $0xc] sm:$0xf]
    %v128 = vld [vmem:[#allocation8 + $0x10] sm:$0xf]
    %v129 = vld [vmem:[#allocation8 + $0x14] sm:$0xf]
    %v130 = vld [vmem:[#allocation8 + $0x18] sm:$0xf]
    %v131 = vld [vmem:[#allocation8 + $0x1c] sm:$0xf]
    %v132 = vld [vmem:[#allocation8 + $0x20] sm:$0xf]
    %v133 = vld [vmem:[#allocation8 + $0x24] sm:$0xf]
    %v134 = vld [vmem:[#allocation8 + $0x28] sm:$0xf]
    %v135 = vld [vmem:[#allocation8 + $0x2c] sm:$0xf]
    %v136 = vld [vmem:[#allocation8 + $0x30] sm:$0xf]
    %v137 = vld [vmem:[#allocation8 + $0x34] sm:$0xf]
    %v138 = vld [vmem:[#allocation8 + $0x38] sm:$0xf]
    %v139 = vld [vmem:[#allocation8 + $0x3c] sm:$0xf]
    %v140 = vld [vmem:[#allocation10] sm:$0xff]
    %v141 = vpack.c.bf16 %v91, %v90
    %v142 = vlaneseq
    %v143 = vshrl.u32 %v142, 7
    %v144 = vsub.s32 0, %v143
    %v145 = vrot.slane %v140, %v144
    %v162 = vunpack.c.l.b16 %v92
    %v163 = vunpack.c.l.b16 %v93
    %v164 = vunpack.c.l.b16 %v94
    %v165 = vunpack.c.l.b16 %v95
    %v166 = vunpack.c.l.b16 %v96
    %v167 = vunpack.c.l.b16 %v97
    %v168 = vunpack.c.l.b16 %v98
    %v169 = vunpack.c.l.b16 %v99
    %v170 = vunpack.c.l.b16 %v100
    %v171 = vunpack.c.l.b16 %v101
    %v172 = vunpack.c.l.b16 %v102
    %v173 = vunpack.c.l.b16 %v103
    %v174 = vunpack.c.l.b16 %v104
    %v175 = vunpack.c.l.b16 %v105
    %v176 = vunpack.c.l.b16 %v106
    %v177 = vunpack.c.l.b16 %v107
    %v178 = vpack.c.b16 %v163, %v162
    %v179 = vpack.c.b16 %v165, %v164
    %v180 = vpack.c.b16 %v167, %v166
    %v181 = vpack.c.b16 %v169, %v168
    %v182 = vpack.c.b16 %v171, %v170
    %v183 = vpack.c.b16 %v173, %v172
    %v184 = vpack.c.b16 %v175, %v174
    %v185 = vpack.c.b16 %v177, %v176
    %194 = vmatprep.subr.bf16.mxu0 0
    %195 = vmatpush1.bf16.msra.mxu0 %v178
    %196 = vmatprep.subr.bf16.mxu0 0
    %197 = vmatpush1.bf16.msra.mxu0 %v179
    %198 = vmatprep.subr.bf16.mxu0 0
    %199 = vmatpush1.bf16.msra.mxu0 %v180
    %200 = vmatprep.subr.bf16.mxu0 0
    %201 = vmatpush1.bf16.msra.mxu0 %v181
    %202 = vmatprep.subr.bf16.mxu0 0
    %203 = vmatpush1.bf16.msra.mxu0 %v182
    %204 = vmatprep.subr.bf16.mxu0 0
    %205 = vmatpush1.bf16.msra.mxu0 %v183
    %206 = vmatprep.subr.bf16.mxu0 0
    %207 = vmatpush1.bf16.msra.mxu0 %v184
    %208 = vmatprep.subr.bf16.mxu0 0
    %209 = vmatpush1.bf16.msra.mxu0 %v185
    %210 = vmatprep.subr.bf16.mxu0 0
    %211 = vmatpush1.bf16.msra.mxu0 0
    %212 = vmatprep.subr.bf16.mxu0 0
    %213 = vmatpush1.bf16.msra.mxu0 0
    %214 = vmatprep.subr.bf16.mxu0 0
    %215 = vmatpush1.bf16.msra.mxu0 0
    %216 = vmatprep.subr.bf16.mxu0 0
    %217 = vmatpush1.bf16.msra.mxu0 0
    %218 = vmatprep.subr.bf16.mxu0 0
    %219 = vmatpush1.bf16.msra.mxu0 0
    %220 = vmatprep.subr.bf16.mxu0 0
    %221 = vmatpush1.bf16.msra.mxu0 0
    %222 = vmatprep.subr.bf16.mxu0 0
    %223 = vmatpush1.bf16.msra.mxu0 0
    %224 = vmatprep.subr.bf16.mxu0 0
    %225 = vmatpush1.bf16.msra.mxu0 0
    %226 = vmatprep.mubr.bf16.mxu0 0
    %227 = vmatmul.mubr.bf16.gmra.mrb[0].mxu0 %v141
    %v228 = vpop.f32.mrb[0].mxu0
    %v229 = vadd.f32 %v145, %v228
    %v230 = vpop.f32.mrb[0].mxu0
    %v231 = vpop.f32.mrb[0].mxu0
    %v232 = vadd.f32 %v145, %v231
    %v233 = vpop.f32.mrb[0].mxu0
    %234 = vdwg.mxu0
    %235 = vadd.xlane.f32.xlu0 %v229
    %v236 = vpop.xlane.xlu0 %235
    %237 = vadd.xlane.f32.xlu0 %v232
    %v238 = vpop.xlane.xlu0 %237
    %v239 = vmul.f32 %v229, %v229
    %v240 = vmul.f32 %v232, %v232
    %241 = vadd.xlane.f32.xlu0 %v239
    %v242 = vpop.xlane.xlu0 %241
    %243 = vadd.xlane.f32.xlu0 %v240
    %v244 = vpop.xlane.xlu0 %243
    %v245 = vmul.f32 %v236, 0.03125
    %v246 = vmul.f32 %v238, 0.03125
    %v247 = vmul.f32 %v242, 0.03125
    %v248 = vmul.f32 %v244, 0.03125
    %v249 = vmul.f32 %v245, %v245
    %v250 = vmul.f32 %v246, %v246
    %v251 = vsub.f32 %v247, %v249
    %v252 = vsub.f32 %v248, %v250
    %v253 = vmax.f32 %v251, 0.0
    %v254 = vmax.f32 %v252, 0.0
    %v255 = vsub.f32 %v229, %v245
    %v256 = vsub.f32 %v232, %v246
    %v257 = vadd.f32 %v253, 1e-05
    %v258 = vadd.f32 %v254, 1e-05
    %v259 = vrsqrt.pop %v257
    %v260 = vrsqrt.pop %v258
    %v261 = vmul.f32 %v255, %v259
    %v262 = vmul.f32 %v256, %v260
    %v263 = vlaneseq
    %v264 = vshrl.u32 %v263, 7
    %v265 = vsub.s32 1, %v264
    %v266 = vrot.slane %v140, %v265
    %v267 = vmul.f32 %v261, %v266
    %v268 = vmul.f32 %v262, %v266
    %v269 = vlaneseq
    %v270 = vshrl.u32 %v269, 7
    %v271 = vsub.s32 2, %v270
    %v272 = vrot.slane %v140, %v271
    %v273 = vadd.f32 %v267, %v272
    %v274 = vadd.f32 %v268, %v272
    %275 = vadd.xlane.f32.xlu0 %v273
    %v276 = vpop.xlane.xlu0 %275
    %277 = vadd.xlane.f32.xlu0 %v274
    %v278 = vpop.xlane.xlu0 %277
    %v279 = vmul.f32 %v273, %v273
    %v280 = vmul.f32 %v274, %v274
    %281 = vadd.xlane.f32.xlu0 %v279
    %v282 = vpop.xlane.xlu0 %281
    %283 = vadd.xlane.f32.xlu0 %v280
    %v284 = vpop.xlane.xlu0 %283
    %v285 = vmul.f32 %v276, 0.03125
    %v286 = vmul.f32 %v278, 0.03125
    %v287 = vmul.f32 %v282, 0.03125
    %v288 = vmul.f32 %v284, 0.03125
    %v289 = vmul.f32 %v285, %v285
    %v290 = vmul.f32 %v286, %v286
    %v291 = vsub.f32 %v287, %v289
    %v292 = vsub.f32 %v288, %v290
    %v293 = vmax.f32 %v291, 0.0
    %v294 = vmax.f32 %v292, 0.0
    %v295 = vsub.f32 %v273, %v285
    %v296 = vsub.f32 %v274, %v286
    %v297 = vadd.f32 %v293, 1e-05
    %v298 = vadd.f32 %v294, 1e-05
    %v299 = vrsqrt.pop %v297
    %v300 = vrsqrt.pop %v298
    %v301 = vmul.f32 %v295, %v299
    %v302 = vmul.f32 %v296, %v300
    %v303 = vlaneseq
    %v304 = vshrl.u32 %v303, 7
    %v305 = vsub.s32 3, %v304
    %v306 = vrot.slane %v140, %v305
    %v307 = vmul.f32 %v301, %v306
    %v308 = vmul.f32 %v302, %v306
    %v309 = vlaneseq
    %v310 = vshrl.u32 %v309, 7
    %v311 = vsub.s32 4, %v310
    %v312 = vrot.slane %v140, %v311
    %v313 = vadd.f32 %v307, %v312
    %v314 = vadd.f32 %v308, %v312
    %v315 = vpack.c.bf16 %v314, %v313
    %v316 = vlaneseq
    %v317 = vshrl.u32 %v316, 7
    %v318 = vsub.s32 5, %v317
    %v319 = vrot.slane %v140, %v318
    %v336 = vunpack.c.l.b16 %v108
    %v337 = vunpack.c.l.b16 %v109
    %v338 = vunpack.c.l.b16 %v110
    %v339 = vunpack.c.l.b16 %v111
    %v340 = vunpack.c.l.b16 %v112
    %v341 = vunpack.c.l.b16 %v113
    %v342 = vunpack.c.l.b16 %v114
    %v343 = vunpack.c.l.b16 %v115
    %v344 = vunpack.c.l.b16 %v116
    %v345 = vunpack.c.l.b16 %v117
    %v346 = vunpack.c.l.b16 %v118
    %v347 = vunpack.c.l.b16 %v119
    %v348 = vunpack.c.l.b16 %v120
    %v349 = vunpack.c.l.b16 %v121
    %v350 = vunpack.c.l.b16 %v122
    %v351 = vunpack.c.l.b16 %v123
    %v352 = vpack.c.b16 %v337, %v336
    %v353 = vpack.c.b16 %v339, %v338
    %v354 = vpack.c.b16 %v341, %v340
    %v355 = vpack.c.b16 %v343, %v342
    %v356 = vpack.c.b16 %v345, %v344
    %v357 = vpack.c.b16 %v347, %v346
    %v358 = vpack.c.b16 %v349, %v348
    %v359 = vpack.c.b16 %v351, %v350
    %368 = vmatprep.subr.bf16.mxu0 0
    %369 = vmatpush1.bf16.msra.mxu0 %v352
    %370 = vmatprep.subr.bf16.mxu0 0
    %371 = vmatpush1.bf16.msra.mxu0 %v353
    %372 = vmatprep.subr.bf16.mxu0 0
    %373 = vmatpush1.bf16.msra.mxu0 %v354
    %374 = vmatprep.subr.bf16.mxu0 0
    %375 = vmatpush1.bf16.msra.mxu0 %v355
    %376 = vmatprep.subr.bf16.mxu0 0
    %377 = vmatpush1.bf16.msra.mxu0 %v356
    %378 = vmatprep.subr.bf16.mxu0 0
    %379 = vmatpush1.bf16.msra.mxu0 %v357
    %380 = vmatprep.subr.bf16.mxu0 0
    %381 = vmatpush1.bf16.msra.mxu0 %v358
    %382 = vmatprep.subr.bf16.mxu0 0
    %383 = vmatpush1.bf16.msra.mxu0 %v359
    %384 = vmatprep.subr.bf16.mxu0 0
    %385 = vmatpush1.bf16.msra.mxu0 0
    %386 = vmatprep.subr.bf16.mxu0 0
    %387 = vmatpush1.bf16.msra.mxu0 0
    %388 = vmatprep.subr.bf16.mxu0 0
    %389 = vmatpush1.bf16.msra.mxu0 0
    %390 = vmatprep.subr.bf16.mxu0 0
    %391 = vmatpush1.bf16.msra.mxu0 0
    %392 = vmatprep.subr.bf16.mxu0 0
    %393 = vmatpush1.bf16.msra.mxu0 0
    %394 = vmatprep.subr.bf16.mxu0 0
    %395 = vmatpush1.bf16.msra.mxu0 0
    %396 = vmatprep.subr.bf16.mxu0 0
    %397 = vmatpush1.bf16.msra.mxu0 0
    %398 = vmatprep.subr.bf16.mxu0 0
    %399 = vmatpush1.bf16.msra.mxu0 0
    %400 = vmatprep.mubr.bf16.mxu0 0
    %401 = vmatmul.mubr.bf16.gmra.mrb[0].mxu0 %v315
    %v402 = vpop.f32.mrb[0].mxu0
    %v403 = vadd.f32 %v319, %v402
    %v404 = vpop.f32.mrb[0].mxu0
    %v405 = vpop.f32.mrb[0].mxu0
    %v406 = vadd.f32 %v319, %v405
    %v407 = vpop.f32.mrb[0].mxu0
    %408 = vdwg.mxu0
    %v409 = vmax.f32 %v403, 0.0
    %v410 = vmax.f32 %v406, 0.0
    %v411 = vpack.c.bf16 %v410, %v409
    %v412 = vlaneseq
    %v413 = vshrl.u32 %v412, 7
    %v414 = vsub.s32 6, %v413
    %v415 = vrot.slane %v140, %v414
    %v432 = vunpack.c.l.b16 %v124
    %v433 = vunpack.c.l.b16 %v125
    %v434 = vunpack.c.l.b16 %v126
    %v435 = vunpack.c.l.b16 %v127
    %v436 = vunpack.c.l.b16 %v128
    %v437 = vunpack.c.l.b16 %v129
    %v438 = vunpack.c.l.b16 %v130
    %v439 = vunpack.c.l.b16 %v131
    %v440 = vunpack.c.l.b16 %v132
    %v441 = vunpack.c.l.b16 %v133
    %v442 = vunpack.c.l.b16 %v134
    %v443 = vunpack.c.l.b16 %v135
    %v444 = vunpack.c.l.b16 %v136
    %v445 = vunpack.c.l.b16 %v137
    %v446 = vunpack.c.l.b16 %v138
    %v447 = vunpack.c.l.b16 %v139
    %v448 = vpack.c.b16 %v433, %v432
    %v449 = vpack.c.b16 %v435, %v434
    %v450 = vpack.c.b16 %v437, %v436
    %v451 = vpack.c.b16 %v439, %v438
    %v452 = vpack.c.b16 %v441, %v440
    %v453 = vpack.c.b16 %v443, %v442
    %v454 = vpack.c.b16 %v445, %v444
    %v455 = vpack.c.b16 %v447, %v446
    %464 = vmatprep.subr.bf16.mxu0 0
    %465 = vmatpush1.bf16.msra.mxu0 %v448
    %466 = vmatprep.subr.bf16.mxu0 0
    %467 = vmatpush1.bf16.msra.mxu0 %v449
    %468 = vmatprep.subr.bf16.mxu0 0
    %469 = vmatpush1.bf16.msra.mxu0 %v450
    %470 = vmatprep.subr.bf16.mxu0 0
    %471 = vmatpush1.bf16.msra.mxu0 %v451
    %472 = vmatprep.subr.bf16.mxu0 0
    %473 = vmatpush1.bf16.msra.mxu0 %v452
    %474 = vmatprep.subr.bf16.mxu0 0
    %475 = vmatpush1.bf16.msra.mxu0 %v453
    %476 = vmatprep.subr.bf16.mxu0 0
    %477 = vmatpush1.bf16.msra.mxu0 %v454
    %478 = vmatprep.subr.bf16.mxu0 0
    %479 = vmatpush1.bf16.msra.mxu0 %v455
    %480 = vmatprep.subr.bf16.mxu0 0
    %481 = vmatpush1.bf16.msra.mxu0 0
    %482 = vmatprep.subr.bf16.mxu0 0
    %483 = vmatpush1.bf16.msra.mxu0 0
    %484 = vmatprep.subr.bf16.mxu0 0
    %485 = vmatpush1.bf16.msra.mxu0 0
    %486 = vmatprep.subr.bf16.mxu0 0
    %487 = vmatpush1.bf16.msra.mxu0 0
    %488 = vmatprep.subr.bf16.mxu0 0
    %489 = vmatpush1.bf16.msra.mxu0 0
    %490 = vmatprep.subr.bf16.mxu0 0
    %491 = vmatpush1.bf16.msra.mxu0 0
    %492 = vmatprep.subr.bf16.mxu0 0
    %493 = vmatpush1.bf16.msra.mxu0 0
    %494 = vmatprep.subr.bf16.mxu0 0
    %495 = vmatpush1.bf16.msra.mxu0 0
    %496 = vmatprep.mubr.bf16.mxu0 0
    %497 = vmatmul.mubr.bf16.gmra.mrb[0].mxu0 %v411
    %v498 = vpop.f32.mrb[0].mxu0
    %v499 = vadd.f32 %v415, %v498
    %v500 = vpop.f32.mrb[0].mxu0
    %v501 = vpop.f32.mrb[0].mxu0
    %v502 = vadd.f32 %v415, %v501
    %v503 = vpop.f32.mrb[0].mxu0
    %504 = vdwg.mxu0
    %v505 = vadd.f32 %v499, %v273
    %v506 = vadd.f32 %v502, %v274
    %s507 = scalar_lea.vmem [#allocation5], 64
    %v508 = vld [vmem:[%s507] sm:$0xf]
    %v509 = vld [vmem:[%s507 + $0x4] sm:$0xf]
    %v510 = vld [vmem:[%s507 + $0x8] sm:$0xf]
    %v511 = vld [vmem:[%s507 + $0xc] sm:$0xf]
    %v512 = vld [vmem:[%s507 + $0x10] sm:$0xf]
    %v513 = vld [vmem:[%s507 + $0x14] sm:$0xf]
    %v514 = vld [vmem:[%s507 + $0x18] sm:$0xf]
    %v515 = vld [vmem:[%s507 + $0x1c] sm:$0xf]
    %v516 = vld [vmem:[%s507 + $0x20] sm:$0xf]
    %v517 = vld [vmem:[%s507 + $0x24] sm:$0xf]
    %v518 = vld [vmem:[%s507 + $0x28] sm:$0xf]
    %v519 = vld [vmem:[%s507 + $0x2c] sm:$0xf]
    %v520 = vld [vmem:[%s507 + $0x30] sm:$0xf]
    %v521 = vld [vmem:[%s507 + $0x34] sm:$0xf]
    %v522 = vld [vmem:[%s507 + $0x38] sm:$0xf]
    %v523 = vld [vmem:[%s507 + $0x3c] sm:$0xf]
    %s524 = scalar_lea.vmem [#allocation7], 64
    %v525 = vld [vmem:[%s524] sm:$0xf]
    %v526 = vld [vmem:[%s524 + $0x4] sm:$0xf]
    %v527 = vld [vmem:[%s524 + $0x8] sm:$0xf]
    %v528 = vld [vmem:[%s524 + $0xc] sm:$0xf]
    %v529 = vld [vmem:[%s524 + $0x10] sm:$0xf]
    %v530 = vld [vmem:[%s524 + $0x14] sm:$0xf]
    %v531 = vld [vmem:[%s524 + $0x18] sm:$0xf]
    %v532 = vld [vmem:[%s524 + $0x1c] sm:$0xf]
    %v533 = vld [vmem:[%s524 + $0x20] sm:$0xf]
    %v534 = vld [vmem:[%s524 + $0x24] sm:$0xf]
    %v535 = vld [vmem:[%s524 + $0x28] sm:$0xf]
    %v536 = vld [vmem:[%s524 + $0x2c] sm:$0xf]
    %v537 = vld [vmem:[%s524 + $0x30] sm:$0xf]
    %v538 = vld [vmem:[%s524 + $0x34] sm:$0xf]
    %v539 = vld [vmem:[%s524 + $0x38] sm:$0xf]
    %v540 = vld [vmem:[%s524 + $0x3c] sm:$0xf]
    %s541 = scalar_lea.vmem [#allocation8], 64
    %v542 = vld [vmem:[%s541] sm:$0xf]
    %v543 = vld [vmem:[%s541 + $0x4] sm:$0xf]
    %v544 = vld [vmem:[%s541 + $0x8] sm:$0xf]
    %v545 = vld [vmem:[%s541 + $0xc] sm:$0xf]
    %v546 = vld [vmem:[%s541 + $0x10] sm:$0xf]
    %v547 = vld [vmem:[%s541 + $0x14] sm:$0xf]
    %v548 = vld [vmem:[%s541 + $0x18] sm:$0xf]
    %v549 = vld [vmem:[%s541 + $0x1c] sm:$0xf]
    %v550 = vld [vmem:[%s541 + $0x20] sm:$0xf]
    %v551 = vld [vmem:[%s541 + $0x24] sm:$0xf]
    %v552 = vld [vmem:[%s541 + $0x28] sm:$0xf]
    %v553 = vld [vmem:[%s541 + $0x2c] sm:$0xf]
    %v554 = vld [vmem:[%s541 + $0x30] sm:$0xf]
    %v555 = vld [vmem:[%s541 + $0x34] sm:$0xf]
    %v556 = vld [vmem:[%s541 + $0x38] sm:$0xf]
    %v557 = vld [vmem:[%s541 + $0x3c] sm:$0xf]
    %s558 = scalar_lea.vmem [#allocation10], 8
    %v559 = vld [vmem:[%s558] sm:$0xff]
    %v560 = vpack.c.bf16 %v506, %v505
    %v561 = vlaneseq
    %v562 = vshrl.u32 %v561, 7
    %v563 = vsub.s32 0, %v562
    %v564 = vrot.slane %v559, %v563
    %v581 = vunpack.c.l.b16 %v508
    %v582 = vunpack.c.l.b16 %v509
    %v583 = vunpack.c.l.b16 %v510
    %v584 = vunpack.c.l.b16 %v511
    %v585 = vunpack.c.l.b16 %v512
    %v586 = vunpack.c.l.b16 %v513
    %v587 = vunpack.c.l.b16 %v514
    %v588 = vunpack.c.l.b16 %v515
    %v589 = vunpack.c.l.b16 %v516
    %v590 = vunpack.c.l.b16 %v517
    %v591 = vunpack.c.l.b16 %v518
    %v592 = vunpack.c.l.b16 %v519
    %v593 = vunpack.c.l.b16 %v520
    %v594 = vunpack.c.l.b16 %v521
    %v595 = vunpack.c.l.b16 %v522
    %v596 = vunpack.c.l.b16 %v523
    %v597 = vpack.c.b16 %v582, %v581
    %v598 = vpack.c.b16 %v584, %v583
    %v599 = vpack.c.b16 %v586, %v585
    %v600 = vpack.c.b16 %v588, %v587
    %v601 = vpack.c.b16 %v590, %v589
    %v602 = vpack.c.b16 %v592, %v591
    %v603 = vpack.c.b16 %v594, %v593
    %v604 = vpack.c.b16 %v596, %v595
    %613 = vmatprep.subr.bf16.mxu0 0
    %614 = vmatpush1.bf16.msra.mxu0 %v597
    %615 = vmatprep.subr.bf16.mxu0 0
    %616 = vmatpush1.bf16.msra.mxu0 %v598
    %617 = vmatprep.subr.bf16.mxu0 0
    %618 = vmatpush1.bf16.msra.mxu0 %v599
    %619 = vmatprep.subr.bf16.mxu0 0
    %620 = vmatpush1.bf16.msra.mxu0 %v600
    %621 = vmatprep.subr.bf16.mxu0 0
    %622 = vmatpush1.bf16.msra.mxu0 %v601
    %623 = vmatprep.subr.bf16.mxu0 0
    %624 = vmatpush1.bf16.msra.mxu0 %v602
    %625 = vmatprep.subr.bf16.mxu0 0
    %626 = vmatpush1.bf16.msra.mxu0 %v603
    %627 = vmatprep.subr.bf16.mxu0 0
    %628 = vmatpush1.bf16.msra.mxu0 %v604
    %629 = vmatprep.subr.bf16.mxu0 0
    %630 = vmatpush1.bf16.msra.mxu0 0
    %631 = vmatprep.subr.bf16.mxu0 0
    %632 = vmatpush1.bf16.msra.mxu0 0
    %633 = vmatprep.subr.bf16.mxu0 0
    %634 = vmatpush1.bf16.msra.mxu0 0
    %635 = vmatprep.subr.bf16.mxu0 0
    %636 = vmatpush1.bf16.msra.mxu0 0
    %637 = vmatprep.subr.bf16.mxu0 0
    %638 = vmatpush1.bf16.msra.mxu0 0
    %639 = vmatprep.subr.bf16.mxu0 0
    %640 = vmatpush1.bf16.msra.mxu0 0
    %641 = vmatprep.subr.bf16.mxu0 0
    %642 = vmatpush1.bf16.msra.mxu0 0
    %643 = vmatprep.subr.bf16.mxu0 0
    %644 = vmatpush1.bf16.msra.mxu0 0
    %645 = vmatprep.mubr.bf16.mxu0 0
    %646 = vmatmul.mubr.bf16.gmra.mrb[0].mxu0 %v560
    %v647 = vpop.f32.mrb[0].mxu0
    %v648 = vadd.f32 %v564, %v647
    %v649 = vpop.f32.mrb[0].mxu0
    %v650 = vpop.f32.mrb[0].mxu0
    %v651 = vadd.f32 %v564, %v650
    %v652 = vpop.f32.mrb[0].mxu0
    %653 = vdwg.mxu0
    %654 = vadd.xlane.f32.xlu0 %v648
    %v655 = vpop.xlane.xlu0 %654
    %656 = vadd.xlane.f32.xlu0 %v651
    %v657 = vpop.xlane.xlu0 %656
    %v658 = vmul.f32 %v648, %v648
    %v659 = vmul.f32 %v651, %v651
    %660 = vadd.xlane.f32.xlu0 %v658
    %v661 = vpop.xlane.xlu0 %660
    %662 = vadd.xlane.f32.xlu0 %v659
    %v663 = vpop.xlane.xlu0 %662
    %v664 = vmul.f32 %v655, 0.03125
    %v665 = vmul.f32 %v657, 0.03125
    %v666 = vmul.f32 %v661, 0.03125
    %v667 = vmul.f32 %v663, 0.03125
    %v668 = vmul.f32 %v664, %v664
    %v669 = vmul.f32 %v665, %v665
    %v670 = vsub.f32 %v666, %v668
    %v671 = vsub.f32 %v667, %v669
    %v672 = vmax.f32 %v670, 0.0
    %v673 = vmax.f32 %v671, 0.0
    %v674 = vsub.f32 %v648, %v664
    %v675 = vsub.f32 %v651, %v665
    %v676 = vadd.f32 %v672, 1e-05
    %v677 = vadd.f32 %v673, 1e-05
    %v678 = vrsqrt.pop %v676
    %v679 = vrsqrt.pop %v677
    %v680 = vmul.f32 %v674, %v678
    %v681 = vmul.f32 %v675, %v679
    %v682 = vlaneseq
    %v683 = vshrl.u32 %v682, 7
    %v684 = vsub.s32 1, %v683
    %v685 = vrot.slane %v559, %v684
    %v686 = vmul.f32 %v680, %v685
    %v687 = vmul.f32 %v681, %v685
    %v688 = vlaneseq
    %v689 = vshrl.u32 %v688, 7
    %v690 = vsub.s32 2, %v689
    %v691 = vrot.slane %v559, %v690
    %v692 = vadd.f32 %v686, %v691
    %v693 = vadd.f32 %v687, %v691
    %694 = vadd.xlane.f32.xlu0 %v692
    %v695 = vpop.xlane.xlu0 %694
    %696 = vadd.xlane.f32.xlu0 %v693
    %v697 = vpop.xlane.xlu0 %696
    %v698 = vmul.f32 %v692, %v692
    %v699 = vmul.f32 %v693, %v693
    %700 = vadd.xlane.f32.xlu0 %v698
    %v701 = vpop.xlane.xlu0 %700
    %702 = vadd.xlane.f32.xlu0 %v699
    %v703 = vpop.xlane.xlu0 %702
    %v704 = vmul.f32 %v695, 0.03125
    %v705 = vmul.f32 %v697, 0.03125
    %v706 = vmul.f32 %v701, 0.03125
    %v707 = vmul.f32 %v703, 0.03125
    %v708 = vmul.f32 %v704, %v704
    %v709 = vmul.f32 %v705, %v705
    %v710 = vsub.f32 %v706, %v708
    %v711 = vsub.f32 %v707, %v709
    %v712 = vmax.f32 %v710, 0.0
    %v713 = vmax.f32 %v711, 0.0
    %v714 = vsub.f32 %v692, %v704
    %v715 = vsub.f32 %v693, %v705
    %v716 = vadd.f32 %v712, 1e-05
    %v717 = vadd.f32 %v713, 1e-05
    %v718 = vrsqrt.pop %v716
    %v719 = vrsqrt.pop %v717
    %v720 = vmul.f32 %v714, %v718
    %v721 = vmul.f32 %v715, %v719
    %v722 = vlaneseq
    %v723 = vshrl.u32 %v722, 7
    %v724 = vsub.s32 3, %v723
    %v725 = vrot.slane %v559, %v724
    %v726 = vmul.f32 %v720, %v725
    %v727 = vmul.f32 %v721, %v725
    %v728 = vlaneseq
    %v729 = vshrl.u32 %v728, 7
    %v730 = vsub.s32 4, %v729
    %v731 = vrot.slane %v559, %v730
    %v732 = vadd.f32 %v726, %v731
    %v733 = vadd.f32 %v727, %v731
    %v734 = vpack.c.bf16 %v733, %v732
    %v735 = vlaneseq
    %v736 = vshrl.u32 %v735, 7
    %v737 = vsub.s32 5, %v736
    %v738 = vrot.slane %v559, %v737
    %v755 = vunpack.c.l.b16 %v525
    %v756 = vunpack.c.l.b16 %v526
    %v757 = vunpack.c.l.b16 %v527
    %v758 = vunpack.c.l.b16 %v528
    %v759 = vunpack.c.l.b16 %v529
    %v760 = vunpack.c.l.b16 %v530
    %v761 = vunpack.c.l.b16 %v531
    %v762 = vunpack.c.l.b16 %v532
    %v763 = vunpack.c.l.b16 %v533
    %v764 = vunpack.c.l.b16 %v534
    %v765 = vunpack.c.l.b16 %v535
    %v766 = vunpack.c.l.b16 %v536
    %v767 = vunpack.c.l.b16 %v537
    %v768 = vunpack.c.l.b16 %v538
    %v769 = vunpack.c.l.b16 %v539
    %v770 = vunpack.c.l.b16 %v540
    %v771 = vpack.c.b16 %v756, %v755
    %v772 = vpack.c.b16 %v758, %v757
    %v773 = vpack.c.b16 %v760, %v759
    %v774 = vpack.c.b16 %v762, %v761
    %v775 = vpack.c.b16 %v764, %v763
    %v776 = vpack.c.b16 %v766, %v765
    %v777 = vpack.c.b16 %v768, %v767
    %v778 = vpack.c.b16 %v770, %v769
    %787 = vmatprep.subr.bf16.mxu0 0
    %788 = vmatpush1.bf16.msra.mxu0 %v771
    %789 = vmatprep.subr.bf16.mxu0 0
    %790 = vmatpush1.bf16.msra.mxu0 %v772
    %791 = vmatprep.subr.bf16.mxu0 0
    %792 = vmatpush1.bf16.msra.mxu0 %v773
    %793 = vmatprep.subr.bf16.mxu0 0
    %794 = vmatpush1.bf16.msra.mxu0 %v774
    %795 = vmatprep.subr.bf16.mxu0 0
    %796 = vmatpush1.bf16.msra.mxu0 %v775
    %797 = vmatprep.subr.bf16.mxu0 0
    %798 = vmatpush1.bf16.msra.mxu0 %v776
    %799 = vmatprep.subr.bf16.mxu0 0
    %800 = vmatpush1.bf16.msra.mxu0 %v777
    %801 = vmatprep.subr.bf16.mxu0 0
    %802 = vmatpush1.bf16.msra.mxu0 %v778
    %803 = vmatprep.subr.bf16.mxu0 0
    %804 = vmatpush1.bf16.msra.mxu0 0
    %805 = vmatprep.subr.bf16.mxu0 0
    %806 = vmatpush1.bf16.msra.mxu0 0
    %807 = vmatprep.subr.bf16.mxu0 0
    %808 = vmatpush1.bf16.msra.mxu0 0
    %809 = vmatprep.subr.bf16.mxu0 0
    %810 = vmatpush1.bf16.msra.mxu0 0
    %811 = vmatprep.subr.bf16.mxu0 0
    %812 = vmatpush1.bf16.msra.mxu0 0
    %813 = vmatprep.subr.bf16.mxu0 0
    %814 = vmatpush1.bf16.msra.mxu0 0
    %815 = vmatprep.subr.bf16.mxu0 0
    %816 = vmatpush1.bf16.msra.mxu0 0
    %817 = vmatprep.subr.bf16.mxu0 0
    %818 = vmatpush1.bf16.msra.mxu0 0
    %819 = vmatprep.mubr.bf16.mxu0 0
    %820 = vmatmul.mubr.bf16.gmra.mrb[0].mxu0 %v734
    %v821 = vpop.f32.mrb[0].mxu0
    %v822 = vadd.f32 %v738, %v821
    %v823 = vpop.f32.mrb[0].mxu0
    %v824 = vpop.f32.mrb[0].mxu0
    %v825 = vadd.f32 %v738, %v824
    %v826 = vpop.f32.mrb[0].mxu0
    %827 = vdwg.mxu0
    %v828 = vmax.f32 %v822, 0.0
    %v829 = vmax.f32 %v825, 0.0
    %v830 = vpack.c.bf16 %v829, %v828
    %v831 = vlaneseq
    %v832 = vshrl.u32 %v831, 7
    %v833 = vsub.s32 6, %v832
    %v834 = vrot.slane %v559, %v833
    %v851 = vunpack.c.l.b16 %v542
    %v852 = vunpack.c.l.b16 %v543
    %v853 = vunpack.c.l.b16 %v544
    %v854 = vunpack.c.l.b16 %v545
    %v855 = vunpack.c.l.b16 %v546
    %v856 = vunpack.c.l.b16 %v547
    %v857 = vunpack.c.l.b16 %v548
    %v858 = vunpack.c.l.b16 %v549
    %v859 = vunpack.c.l.b16 %v550
    %v860 = vunpack.c.l.b16 %v551
    %v861 = vunpack.c.l.b16 %v552
    %v862 = vunpack.c.l.b16 %v553
    %v863 = vunpack.c.l.b16 %v554
    %v864 = vunpack.c.l.b16 %v555
    %v865 = vunpack.c.l.b16 %v556
    %v866 = vunpack.c.l.b16 %v557
    %v867 = vpack.c.b16 %v852, %v851
    %v868 = vpack.c.b16 %v854, %v853
    %v869 = vpack.c.b16 %v856, %v855
    %v870 = vpack.c.b16 %v858, %v857
    %v871 = vpack.c.b16 %v860, %v859
    %v872 = vpack.c.b16 %v862, %v861
    %v873 = vpack.c.b16 %v864, %v863
    %v874 = vpack.c.b16 %v866, %v865
    %883 = vmatprep.subr.bf16.mxu0 0
    %884 = vmatpush1.bf16.msra.mxu0 %v867
    %885 = vmatprep.subr.bf16.mxu0 0
    %886 = vmatpush1.bf16.msra.mxu0 %v868
    %887 = vmatprep.subr.bf16.mxu0 0
    %888 = vmatpush1.bf16.msra.mxu0 %v869
    %889 = vmatprep.subr.bf16.mxu0 0
    %890 = vmatpush1.bf16.msra.mxu0 %v870
    %891 = vmatprep.subr.bf16.mxu0 0
    %892 = vmatpush1.bf16.msra.mxu0 %v871
    %893 = vmatprep.subr.bf16.mxu0 0
    %894 = vmatpush1.bf16.msra.mxu0 %v872
    %895 = vmatprep.subr.bf16.mxu0 0
    %896 = vmatpush1.bf16.msra.mxu0 %v873
    %897 = vmatprep.subr.bf16.mxu0 0
    %898 = vmatpush1.bf16.msra.mxu0 %v874
    %899 = vmatprep.subr.bf16.mxu0 0
    %900 = vmatpush1.bf16.msra.mxu0 0
    %901 = vmatprep.subr.bf16.mxu0 0
    %902 = vmatpush1.bf16.msra.mxu0 0
    %903 = vmatprep.subr.bf16.mxu0 0
    %904 = vmatpush1.bf16.msra.mxu0 0
    %905 = vmatprep.subr.bf16.mxu0 0
    %906 = vmatpush1.bf16.msra.mxu0 0
    %907 = vmatprep.subr.bf16.mxu0 0
    %908 = vmatpush1.bf16.msra.mxu0 0
    %909 = vmatprep.subr.bf16.mxu0 0
    %910 = vmatpush1.bf16.msra.mxu0 0
    %911 = vmatprep.subr.bf16.mxu0 0
    %912 = vmatpush1.bf16.msra.mxu0 0
    %913 = vmatprep.subr.bf16.mxu0 0
    %914 = vmatpush1.bf16.msra.mxu0 0
    %915 = vmatprep.mubr.bf16.mxu0 0
    %916 = vmatmul.mubr.bf16.gmra.mrb[0].mxu0 %v830
    %v917 = vpop.f32.mrb[0].mxu0
    %v918 = vadd.f32 %v834, %v917
    %v919 = vpop.f32.mrb[0].mxu0
    %v920 = vpop.f32.mrb[0].mxu0
    %v921 = vadd.f32 %v834, %v920
    %v922 = vpop.f32.mrb[0].mxu0
    %923 = vdwg.mxu0
    %v924 = vadd.f32 %v918, %v692
    %v925 = vadd.f32 %v921, %v693
    %s926 = scalar_lea.vmem [#allocation5], 128
    %v927 = vld [vmem:[%s926] sm:$0xf]
    %v928 = vld [vmem:[%s926 + $0x4] sm:$0xf]
    %v929 = vld [vmem:[%s926 + $0x8] sm:$0xf]
    %v930 = vld [vmem:[%s926 + $0xc] sm:$0xf]
    %v931 = vld [vmem:[%s926 + $0x10] sm:$0xf]
    %v932 = vld [vmem:[%s926 + $0x14] sm:$0xf]
    %v933 = vld [vmem:[%s926 + $0x18] sm:$0xf]
    %v934 = vld [vmem:[%s926 + $0x1c] sm:$0xf]
    %v935 = vld [vmem:[%s926 + $0x20] sm:$0xf]
    %v936 = vld [vmem:[%s926 + $0x24] sm:$0xf]
    %v937 = vld [vmem:[%s926 + $0x28] sm:$0xf]
    %v938 = vld [vmem:[%s926 + $0x2c] sm:$0xf]
    %v939 = vld [vmem:[%s926 + $0x30] sm:$0xf]
    %v940 = vld [vmem:[%s926 + $0x34] sm:$0xf]
    %v941 = vld [vmem:[%s926 + $0x38] sm:$0xf]
    %v942 = vld [vmem:[%s926 + $0x3c] sm:$0xf]
    %s943 = scalar_lea.vmem [#allocation7], 128
    %v944 = vld [vmem:[%s943] sm:$0xf]
    %v945 = vld [vmem:[%s943 + $0x4] sm:$0xf]
    %v946 = vld [vmem:[%s943 + $0x8] sm:$0xf]
    %v947 = vld [vmem:[%s943 + $0xc] sm:$0xf]
    %v948 = vld [vmem:[%s943 + $0x10] sm:$0xf]
    %v949 = vld [vmem:[%s943 + $0x14] sm:$0xf]
    %v950 = vld [vmem:[%s943 + $0x18] sm:$0xf]
    %v951 = vld [vmem:[%s943 + $0x1c] sm:$0xf]
    %v952 = vld [vmem:[%s943 + $0x20] sm:$0xf]
    %v953 = vld [vmem:[%s943 + $0x24] sm:$0xf]
    %v954 = vld [vmem:[%s943 + $0x28] sm:$0xf]
    %v955 = vld [vmem:[%s943 + $0x2c] sm:$0xf]
    %v956 = vld [vmem:[%s943 + $0x30] sm:$0xf]
    %v957 = vld [vmem:[%s943 + $0x34] sm:$0xf]
    %v958 = vld [vmem:[%s943 + $0x38] sm:$0xf]
    %v959 = vld [vmem:[%s943 + $0x3c] sm:$0xf]
    %s960 = scalar_lea.vmem [#allocation8], 128
    %v961 = vld [vmem:[%s960] sm:$0xf]
    %v962 = vld [vmem:[%s960 + $0x4] sm:$0xf]
    %v963 = vld [vmem:[%s960 + $0x8] sm:$0xf]
    %v964 = vld [vmem:[%s960 + $0xc] sm:$0xf]
    %v965 = vld [vmem:[%s960 + $0x10] sm:$0xf]
    %v966 = vld [vmem:[%s960 + $0x14] sm:$0xf]
    %v967 = vld [vmem:[%s960 + $0x18] sm:$0xf]
    %v968 = vld [vmem:[%s960 + $0x1c] sm:$0xf]
    %v969 = vld [vmem:[%s960 + $0x20] sm:$0xf]
    %v970 = vld [vmem:[%s960 + $0x24] sm:$0xf]
    %v971 = vld [vmem:[%s960 + $0x28] sm:$0xf]
    %v972 = vld [vmem:[%s960 + $0x2c] sm:$0xf]
    %v973 = vld [vmem:[%s960 + $0x30] sm:$0xf]
    %v974 = vld [vmem:[%s960 + $0x34] sm:$0xf]
    %v975 = vld [vmem:[%s960 + $0x38] sm:$0xf]
    %v976 = vld [vmem:[%s960 + $0x3c] sm:$0xf]
    %s977 = scalar_lea.vmem [#allocation10], 16
    %v978 = vld [vmem:[%s977] sm:$0xff]
    %v979 = vpack.c.bf16 %v925, %v924
    %v980 = vlaneseq
    %v981 = vshrl.u32 %v980, 7
    %v982 = vsub.s32 0, %v981
    %v983 = vrot.slane %v978, %v982
    %v1000 = vunpack.c.l.b16 %v927
    %v1001 = vunpack.c.l.b16 %v928
    %v1002 = vunpack.c.l.b16 %v929
    %v1003 = vunpack.c.l.b16 %v930
    %v1004 = vunpack.c.l.b16 %v931
    %v1005 = vunpack.c.l.b16 %v932
    %v1006 = vunpack.c.l.b16 %v933
    %v1007 = vunpack.c.l.b16 %v934
    %v1008 = vunpack.c.l.b16 %v935
    %v1009 = vunpack.c.l.b16 %v936
    %v1010 = vunpack.c.l.b16 %v937
    %v1011 = vunpack.c.l.b16 %v938
    %v1012 = vunpack.c.l.b16 %v939
    %v1013 = vunpack.c.l.b16 %v940
    %v1014 = vunpack.c.l.b16 %v941
    %v1015 = vunpack.c.l.b16 %v942
    %v1016 = vpack.c.b16 %v1001, %v1000
    %v1017 = vpack.c.b16 %v1003, %v1002
    %v1018 = vpack.c.b16 %v1005, %v1004
    %v1019 = vpack.c.b16 %v1007, %v1006
    %v1020 = vpack.c.b16 %v1009, %v1008
    %v1021 = vpack.c.b16 %v1011, %v1010
    %v1022 = vpack.c.b16 %v1013, %v1012
    %v1023 = vpack.c.b16 %v1015, %v1014
    %1032 = vmatprep.subr.bf16.mxu0 0
    %1033 = vmatpush1.bf16.msra.mxu0 %v1016
    %1034 = vmatprep.subr.bf16.mxu0 0
    %1035 = vmatpush1.bf16.msra.mxu0 %v1017
    %1036 = vmatprep.subr.bf16.mxu0 0
    %1037 = vmatpush1.bf16.msra.mxu0 %v1018
    %1038 = vmatprep.subr.bf16.mxu0 0
    %1039 = vmatpush1.bf16.msra.mxu0 %v1019
    %1040 = vmatprep.subr.bf16.mxu0 0
    %1041 = vmatpush1.bf16.msra.mxu0 %v1020
    %1042 = vmatprep.subr.bf16.mxu0 0
    %1043 = vmatpush1.bf16.msra.mxu0 %v1021
    %1044 = vmatprep.subr.bf16.mxu0 0
    %1045 = vmatpush1.bf16.msra.mxu0 %v1022
    %1046 = vmatprep.subr.bf16.mxu0 0
    %1047 = vmatpush1.bf16.msra.mxu0 %v1023
    %1048 = vmatprep.subr.bf16.mxu0 0
    %1049 = vmatpush1.bf16.msra.mxu0 0
    %1050 = vmatprep.subr.bf16.mxu0 0
    %1051 = vmatpush1.bf16.msra.mxu0 0
    %1052 = vmatprep.subr.bf16.mxu0 0
    %1053 = vmatpush1.bf16.msra.mxu0 0
    %1054 = vmatprep.subr.bf16.mxu0 0
    %1055 = vmatpush1.bf16.msra.mxu0 0
    %1056 = vmatprep.subr.bf16.mxu0 0
    %1057 = vmatpush1.bf16.msra.mxu0 0
    %1058 = vmatprep.subr.bf16.mxu0 0
    %1059 = vmatpush1.bf16.msra.mxu0 0
    %1060 = vmatprep.subr.bf16.mxu0 0
    %1061 = vmatpush1.bf16.msra.mxu0 0
    %1062 = vmatprep.subr.bf16.mxu0 0
    %1063 = vmatpush1.bf16.msra.mxu0 0
    %1064 = vmatprep.mubr.bf16.mxu0 0
    %1065 = vmatmul.mubr.bf16.gmra.mrb[0].mxu0 %v979
    %v1066 = vpop.f32.mrb[0].mxu0
    %v1067 = vadd.f32 %v983, %v1066
    %v1068 = vpop.f32.mrb[0].mxu0
    %v1069 = vpop.f32.mrb[0].mxu0
    %v1070 = vadd.f32 %v983, %v1069
    %v1071 = vpop.f32.mrb[0].mxu0
    %1072 = vdwg.mxu0
    %1073 = vadd.xlane.f32.xlu0 %v1067
    %v1074 = vpop.xlane.xlu0 %1073
    %1075 = vadd.xlane.f32.xlu0 %v1070
    %v1076 = vpop.xlane.xlu0 %1075
    %v1077 = vmul.f32 %v1067, %v1067
    %v1078 = vmul.f32 %v1070, %v1070
    %1079 = vadd.xlane.f32.xlu0 %v1077
    %v1080 = vpop.xlane.xlu0 %1079
    %1081 = vadd.xlane.f32.xlu0 %v1078
    %v1082 = vpop.xlane.xlu0 %1081
    %v1083 = vmul.f32 %v1074, 0.03125
    %v1084 = vmul.f32 %v1076, 0.03125
    %v1085 = vmul.f32 %v1080, 0.03125
    %v1086 = vmul.f32 %v1082, 0.03125
    %v1087 = vmul.f32 %v1083, %v1083
    %v1088 = vmul.f32 %v1084, %v1084
    %v1089 = vsub.f32 %v1085, %v1087
    %v1090 = vsub.f32 %v1086, %v1088
    %v1091 = vmax.f32 %v1089, 0.0
    %v1092 = vmax.f32 %v1090, 0.0
    %v1093 = vsub.f32 %v1067, %v1083
    %v1094 = vsub.f32 %v1070, %v1084
    %v1095 = vadd.f32 %v1091, 1e-05
    %v1096 = vadd.f32 %v1092, 1e-05
    %v1097 = vrsqrt.pop %v1095
    %v1098 = vrsqrt.pop %v1096
    %v1099 = vmul.f32 %v1093, %v1097
    %v1100 = vmul.f32 %v1094, %v1098
    %v1101 = vlaneseq
    %v1102 = vshrl.u32 %v1101, 7
    %v1103 = vsub.s32 1, %v1102
    %v1104 = vrot.slane %v978, %v1103
    %v1105 = vmul.f32 %v1099, %v1104
    %v1106 = vmul.f32 %v1100, %v1104
    %v1107 = vlaneseq
    %v1108 = vshrl.u32 %v1107, 7
    %v1109 = vsub.s32 2, %v1108
    %v1110 = vrot.slane %v978, %v1109
    %v1111 = vadd.f32 %v1105, %v1110
    %v1112 = vadd.f32 %v1106, %v1110
    %1113 = vadd.xlane.f32.xlu0 %v1111
    %v1114 = vpop.xlane.xlu0 %1113
    %1115 = vadd.xlane.f32.xlu0 %v1112
    %v1116 = vpop.xlane.xlu0 %1115
    %v1117 = vmul.f32 %v1111, %v1111
    %v1118 = vmul.f32 %v1112, %v1112
    %1119 = vadd.xlane.f32.xlu0 %v1117
    %v1120 = vpop.xlane.xlu0 %1119
    %1121 = vadd.xlane.f32.xlu0 %v1118
    %v1122 = vpop.xlane.xlu0 %1121
    %v1123 = vmul.f32 %v1114, 0.03125
    %v1124 = vmul.f32 %v1116, 0.03125
    %v1125 = vmul.f32 %v1120, 0.03125
    %v1126 = vmul.f32 %v1122, 0.03125
    %v1127 = vmul.f32 %v1123, %v1123
    %v1128 = vmul.f32 %v1124, %v1124
    %v1129 = vsub.f32 %v1125, %v1127
    %v1130 = vsub.f32 %v1126, %v1128
    %v1131 = vmax.f32 %v1129, 0.0
    %v1132 = vmax.f32 %v1130, 0.0
    %v1133 = vsub.f32 %v1111, %v1123
    %v1134 = vsub.f32 %v1112, %v1124
    %v1135 = vadd.f32 %v1131, 1e-05
    %v1136 = vadd.f32 %v1132, 1e-05
    %v1137 = vrsqrt.pop %v1135
    %v1138 = vrsqrt.pop %v1136
    %v1139 = vmul.f32 %v1133, %v1137
    %v1140 = vmul.f32 %v1134, %v1138
    %v1141 = vlaneseq
    %v1142 = vshrl.u32 %v1141, 7
    %v1143 = vsub.s32 3, %v1142
    %v1144 = vrot.slane %v978, %v1143
    %v1145 = vmul.f32 %v1139, %v1144
    %v1146 = vmul.f32 %v1140, %v1144
    %v1147 = vlaneseq
    %v1148 = vshrl.u32 %v1147, 7
    %v1149 = vsub.s32 4, %v1148
    %v1150 = vrot.slane %v978, %v1149
    %v1151 = vadd.f32 %v1145, %v1150
    %v1152 = vadd.f32 %v1146, %v1150
    %v1153 = vpack.c.bf16 %v1152, %v1151
    %v1154 = vlaneseq
    %v1155 = vshrl.u32 %v1154, 7
    %v1156 = vsub.s32 5, %v1155
    %v1157 = vrot.slane %v978, %v1156
    %v1174 = vunpack.c.l.b16 %v944
    %v1175 = vunpack.c.l.b16 %v945
    %v1176 = vunpack.c.l.b16 %v946
    %v1177 = vunpack.c.l.b16 %v947
    %v1178 = vunpack.c.l.b16 %v948
    %v1179 = vunpack.c.l.b16 %v949
    %v1180 = vunpack.c.l.b16 %v950
    %v1181 = vunpack.c.l.b16 %v951
    %v1182 = vunpack.c.l.b16 %v952
    %v1183 = vunpack.c.l.b16 %v953
    %v1184 = vunpack.c.l.b16 %v954
    %v1185 = vunpack.c.l.b16 %v955
    %v1186 = vunpack.c.l.b16 %v956
    %v1187 = vunpack.c.l.b16 %v957
    %v1188 = vunpack.c.l.b16 %v958
    %v1189 = vunpack.c.l.b16 %v959
    %v1190 = vpack.c.b16 %v1175, %v1174
    %v1191 = vpack.c.b16 %v1177, %v1176
    %v1192 = vpack.c.b16 %v1179, %v1178
    %v1193 = vpack.c.b16 %v1181, %v1180
    %v1194 = vpack.c.b16 %v1183, %v1182
    %v1195 = vpack.c.b16 %v1185, %v1184
    %v1196 = vpack.c.b16 %v1187, %v1186
    %v1197 = vpack.c.b16 %v1189, %v1188
    %1206 = vmatprep.subr.bf16.mxu0 0
    %1207 = vmatpush1.bf16.msra.mxu0 %v1190
    %1208 = vmatprep.subr.bf16.mxu0 0
    %1209 = vmatpush1.bf16.msra.mxu0 %v1191
    %1210 = vmatprep.subr.bf16.mxu0 0
    %1211 = vmatpush1.bf16.msra.mxu0 %v1192
    %1212 = vmatprep.subr.bf16.mxu0 0
    %1213 = vmatpush1.bf16.msra.mxu0 %v1193
    %1214 = vmatprep.subr.bf16.mxu0 0
    %1215 = vmatpush1.bf16.msra.mxu0 %v1194
    %1216 = vmatprep.subr.bf16.mxu0 0
    %1217 = vmatpush1.bf16.msra.mxu0 %v1195
    %1218 = vmatprep.subr.bf16.mxu0 0
    %1219 = vmatpush1.bf16.msra.mxu0 %v1196
    %1220 = vmatprep.subr.bf16.mxu0 0
    %1221 = vmatpush1.bf16.msra.mxu0 %v1197
    %1222 = vmatprep.subr.bf16.mxu0 0
    %1223 = vmatpush1.bf16.msra.mxu0 0
    %1224 = vmatprep.subr.bf16.mxu0 0
    %1225 = vmatpush1.bf16.msra.mxu0 0
    %1226 = vmatprep.subr.bf16.mxu0 0
    %1227 = vmatpush1.bf16.msra.mxu0 0
    %1228 = vmatprep.subr.bf16.mxu0 0
    %1229 = vmatpush1.bf16.msra.mxu0 0
    %1230 = vmatprep.subr.bf16.mxu0 0
    %1231 = vmatpush1.bf16.msra.mxu0 0
    %1232 = vmatprep.subr.bf16.mxu0 0
    %1233 = vmatpush1.bf16.msra.mxu0 0
    %1234 = vmatprep.subr.bf16.mxu0 0
    %1235 = vmatpush1.bf16.msra.mxu0 0
    %1236 = vmatprep.subr.bf16.mxu0 0
    %1237 = vmatpush1.bf16.msra.mxu0 0
    %1238 = vmatprep.mubr.bf16.mxu0 0
    %1239 = vmatmul.mubr.bf16.gmra.mrb[0].mxu0 %v1153
    %v1240 = vpop.f32.mrb[0].mxu0
    %v1241 = vadd.f32 %v1157, %v1240
    %v1242 = vpop.f32.mrb[0].mxu0
    %v1243 = vpop.f32.mrb[0].mxu0
    %v1244 = vadd.f32 %v1157, %v1243
    %v1245 = vpop.f32.mrb[0].mxu0
    %1246 = vdwg.mxu0
    %v1247 = vmax.f32 %v1241, 0.0
    %v1248 = vmax.f32 %v1244, 0.0
    %v1249 = vpack.c.bf16 %v1248, %v1247
    %v1250 = vlaneseq
    %v1251 = vshrl.u32 %v1250, 7
    %v1252 = vsub.s32 6, %v1251
    %v1253 = vrot.slane %v978, %v1252
    %v1270 = vunpack.c.l.b16 %v961
    %v1271 = vunpack.c.l.b16 %v962
    %v1272 = vunpack.c.l.b16 %v963
    %v1273 = vunpack.c.l.b16 %v964
    %v1274 = vunpack.c.l.b16 %v965
    %v1275 = vunpack.c.l.b16 %v966
    %v1276 = vunpack.c.l.b16 %v967
    %v1277 = vunpack.c.l.b16 %v968
    %v1278 = vunpack.c.l.b16 %v969
    %v1279 = vunpack.c.l.b16 %v970
    %v1280 = vunpack.c.l.b16 %v971
    %v1281 = vunpack.c.l.b16 %v972
    %v1282 = vunpack.c.l.b16 %v973
    %v1283 = vunpack.c.l.b16 %v974
    %v1284 = vunpack.c.l.b16 %v975
    %v1285 = vunpack.c.l.b16 %v976
    %v1286 = vpack.c.b16 %v1271, %v1270
    %v1287 = vpack.c.b16 %v1273, %v1272
    %v1288 = vpack.c.b16 %v1275, %v1274
    %v1289 = vpack.c.b16 %v1277, %v1276
    %v1290 = vpack.c.b16 %v1279, %v1278
    %v1291 = vpack.c.b16 %v1281, %v1280
    %v1292 = vpack.c.b16 %v1283, %v1282
    %v1293 = vpack.c.b16 %v1285, %v1284
    %1302 = vmatprep.subr.bf16.mxu0 0
    %1303 = vmatpush1.bf16.msra.mxu0 %v1286
    %1304 = vmatprep.subr.bf16.mxu0 0
    %1305 = vmatpush1.bf16.msra.mxu0 %v1287
    %1306 = vmatprep.subr.bf16.mxu0 0
    %1307 = vmatpush1.bf16.msra.mxu0 %v1288
    %1308 = vmatprep.subr.bf16.mxu0 0
    %1309 = vmatpush1.bf16.msra.mxu0 %v1289
    %1310 = vmatprep.subr.bf16.mxu0 0
    %1311 = vmatpush1.bf16.msra.mxu0 %v1290
    %1312 = vmatprep.subr.bf16.mxu0 0
    %1313 = vmatpush1.bf16.msra.mxu0 %v1291
    %1314 = vmatprep.subr.bf16.mxu0 0
    %1315 = vmatpush1.bf16.msra.mxu0 %v1292
    %1316 = vmatprep.subr.bf16.mxu0 0
    %1317 = vmatpush1.bf16.msra.mxu0 %v1293
    %1318 = vmatprep.subr.bf16.mxu0 0
    %1319 = vmatpush1.bf16.msra.mxu0 0
    %1320 = vmatprep.subr.bf16.mxu0 0
    %1321 = vmatpush1.bf16.msra.mxu0 0
    %1322 = vmatprep.subr.bf16.mxu0 0
    %1323 = vmatpush1.bf16.msra.mxu0 0
    %1324 = vmatprep.subr.bf16.mxu0 0
    %1325 = vmatpush1.bf16.msra.mxu0 0
    %1326 = vmatprep.subr.bf16.mxu0 0
    %1327 = vmatpush1.bf16.msra.mxu0 0
    %1328 = vmatprep.subr.bf16.mxu0 0
    %1329 = vmatpush1.bf16.msra.mxu0 0
    %1330 = vmatprep.subr.bf16.mxu0 0
    %1331 = vmatpush1.bf16.msra.mxu0 0
    %1332 = vmatprep.subr.bf16.mxu0 0
    %1333 = vmatpush1.bf16.msra.mxu0 0
    %1334 = vmatprep.mubr.bf16.mxu0 0
    %1335 = vmatmul.mubr.bf16.gmra.mrb[0].mxu0 %v1249
    %v1336 = vpop.f32.mrb[0].mxu0
    %v1337 = vadd.f32 %v1253, %v1336
    %v1338 = vpop.f32.mrb[0].mxu0
    %v1339 = vpop.f32.mrb[0].mxu0
    %v1340 = vadd.f32 %v1253, %v1339
    %v1341 = vpop.f32.mrb[0].mxu0
    %1342 = vdwg.mxu0
    %v1343 = vadd.f32 %v1337, %v1111
    %v1344 = vadd.f32 %v1340, %v1112
    %1345 = vst [vmem:[#allocation11] sm:$0xff] %v1343
    %1346 = vst [vmem:[#allocation11 + $0x8] sm:$0xff] %v1344
    // Predicated region
    $region42: #{tpu_custom_call.1} parent=1 // pred_check
      _
    $region43: #{tpu_custom_call.1} parent=1 // pred_check_branch
      %1348 = sbr.rel (0) target = $region45
    $region44: #{tpu_custom_call.1} parent=1 // pred_region
      %s1350 = ssub.s32 256, 256
      %1351 = vsyncadd [#allocation4], %s1350
      %s1352 = sshll.u32 [#allocation11], 4
      %s1353 = int_to_ptr.vmem [resolvable:$true] %s1352
      %1358 = dma.vmem_to_hbm [thread:$0]  %s1353, 256, %s5, [#allocation4], 128, 128, 8
    $region45: #{tpu_custom_call.1} parent=1 // pred_fallthru
      _
    // Predicated region
    $region46: #{tpu_custom_call.1} parent=1 // pred_check
      _
    $region47: #{tpu_custom_call.1} parent=1 // pred_check_branch
      %1360 = sbr.rel (0) target = $region49
    $region48: #{tpu_custom_call.1} parent=1 // pred_region
      %1361 = dma.done [#allocation4], 256
    $region49: #{tpu_custom_call.1} parent=1 // pred_fallthru
      _
    %1362 = vsyncpa [#allocation3], 1
    %1363 = vsyncpa [#allocation6], 1
    %1364 = vsyncpa [#allocation9], 1
    %1365 = vsyncpa [#allocation4], 1

</llo_original>
